<compile_context>
chip_gen: v7x
topology: tpu7x:2x2x1
jax: 0.10.0
libtpu: 0.0.40
codegen_flags: <defaults>
</compile_context>

<pallas_src>
import jax
import jax.numpy as jnp
from jax.experimental import pallas as pl
from jax.experimental.pallas import tpu as pltpu

LANE = 128
Q_DIM = 388  # fixed question-feature width from the module spec


def _round_up(x, m):
    return ((x + m - 1) // m) * m


def _sigmoid(x):
    # Single EUP transcendental per element (tanh) + VPU mul/add, instead of
    # exp + divide.  Mathematically identical to 1 / (1 + exp(-x)).
    return 0.5 * jnp.tanh(0.5 * x) + 0.5


def autoencoder_kernel(
    x1_ref, x2_ref,
    g1aw_ref, g1bw_ref, g1b_ref,
    g2w_ref, g2b_ref,
    g3w_ref, g3b_ref,
    h3w_ref, h3b_ref,
    h2w_ref, h2b_ref,
    h1w_ref, h1b_ref,
    out_ref,
):
    # One (TB, *) batch tile.  MXU matmuls take bf16 inputs with f32
    # accumulation; bias add and activations run in f32 on the VPU/EUP.
    x1 = x1_ref[...]            # (tb, num_student)  bf16
    x2 = x2_ref[...]            # (tb, 388)          bf16

    # encoder -- g1 split over the concat boundary: [x1 | x2] @ W1 == x1@W1a + x2@W1b
    h = (jnp.dot(x1, g1aw_ref[...], preferred_element_type=jnp.float32)
         + jnp.dot(x2, g1bw_ref[...], preferred_element_type=jnp.float32)
         + g1b_ref[...])
    h = jnp.maximum(h, 0.0)                                                  # ReLU
    h = jnp.dot(h.astype(jnp.bfloat16), g2w_ref[...],
                preferred_element_type=jnp.float32) + g2b_ref[...]
    h = jnp.tanh(h)                                                          # Tanh
    h = jnp.dot(h.astype(jnp.bfloat16), g3w_ref[...],
                preferred_element_type=jnp.float32) + g3b_ref[...]
    h = _sigmoid(h)                                                          # Sigmoid bottleneck
    # Padding invariant: g3's padded output channels (64 -> 128) carry zero
    # weight + zero bias -> value 0 -> sigmoid 0.5, but h3's matching input
    # rows are zero-padded, so these channels contribute nothing downstream.

    # decoder
    y = jnp.dot(h.astype(jnp.bfloat16), h3w_ref[...],
                preferred_element_type=jnp.float32) + h3b_ref[...]
    y = jnp.tanh(y)                                                          # Tanh
    y = jnp.dot(y.astype(jnp.bfloat16), h2w_ref[...],
                preferred_element_type=jnp.float32) + h2b_ref[...]
    y = jnp.maximum(y, 0.0)                                                  # ReLU
    y = jnp.dot(y.astype(jnp.bfloat16), h1w_ref[...],
                preferred_element_type=jnp.float32) + h1b_ref[...]
    out_ref[...] = _sigmoid(y).astype(out_ref.dtype)                         # Sigmoid output


def _layer_dims(num_student):
    d_in0 = num_student + Q_DIM
    return {
        "g1": (d_in0, 256),
        "g2": (256, 128),
        "g3": (128, 64),
        "h3": (64, 128),
        "h2": (128, 256),
        "h1": (256, num_student),
    }


def make_params(num_student, key):
    """Deterministic synthetic parameters with PyTorch nn.Linear shapes:
    weight (out_features, in_features), bias (out_features,)."""
    params = {}
    for name, (d_in, d_out) in _layer_dims(num_student).items():
        key, kw, kb = jax.random.split(key, 3)
        bound = 1.0 / jnp.sqrt(jnp.float32(d_in))
        params[name + "_w"] = jax.random.uniform(
            kw, (d_out, d_in), jnp.float32, -bound, bound)
        params[name + "_b"] = jax.random.uniform(
            kb, (d_out,), jnp.float32, -bound, bound)
    return params


def prepare_params(params, num_student):
    """One-time parameter prep:
      * transpose to (in, out), cast weights to bf16,
      * split g1 along its input dim into the (inputs | question_info) blocks,
      * zero-pad hidden feature dims up to multiples of 128.

    Padding invariant (do not break): padded bottleneck channels (g3 out
    64->128) have zero weight cols + zero bias and the matching h3 input rows
    are zero-padded, so they contribute nothing.  Padded h1 output columns are
    sliced off in the wrapper."""
    prepared = {}

    # g1: split W^T (num_student+388, 256) into the rows that multiply `inputs`
    # and the rows that multiply `question_info` -> no wrapper-side concat.
    w1 = params["g1_w"].T.astype(jnp.bfloat16)
    prepared["g1a_w"] = w1[:num_student]          # (num_student, 256)
    prepared["g1b_w"] = w1[num_student:]          # (388, 256)
    prepared["g1_b"] = params["g1_b"].astype(jnp.float32).reshape(1, -1)

    for name in ("g2", "g3", "h3", "h2", "h1"):
        d_in, d_out = _layer_dims(num_student)[name]
        d_in_p = _round_up(d_in, LANE)
        d_out_p = _round_up(d_out, LANE)
        w = params[name + "_w"].T.astype(jnp.bfloat16)                 # (in, out)
        w = jnp.pad(w, ((0, d_in_p - d_in), (0, d_out_p - d_out)))     # zero pad
        b = params[name + "_b"].astype(jnp.float32).reshape(1, -1)     # (1, out)
        b = jnp.pad(b, ((0, 0), (0, d_out_p - d_out)))                 # zero pad
        prepared[name + "_w"] = w
        prepared[name + "_b"] = b
    return prepared


def _pick_tile(batch):
    """Batch tile: multiple of 8 sublanes, <= 512 rows, and >= 2 grid steps
    whenever the batch allows it (so v7x megacore can split the grid)."""
    b8 = _round_up(max(batch, 1), 8)
    if b8 <= 8:
        return b8
    return min(512, _round_up(pl.cdiv(b8, 2), 8))


_WEIGHT_NAMES = ("g1a_w", "g1b_w", "g1_b", "g2_w", "g2_b", "g3_w", "g3_b",
                 "h3_w", "h3_b", "h2_w", "h2_b", "h1_w", "h1_b")


def autoencoder_forward(inputs, question_info, prepared, num_student,
                        out_dtype=jnp.bfloat16):
    """inputs: (B, num_student), question_info: (B, 388) -> (B, num_student)."""
    B, d1 = inputs.shape
    d2 = question_info.shape[1]
    n_out_p = prepared["h1_w"].shape[1]

    # bf16 activation stream at the kernel boundary (weights are already bf16).
    x1 = inputs.astype(jnp.bfloat16)
    x2 = question_info.astype(jnp.bfloat16)

    tb = _pick_tile(B)
    b_pad = _round_up(B, tb)
    if b_pad != B:
        x1 = jnp.pad(x1, ((0, b_pad - B), (0, 0)))
        x2 = jnp.pad(x2, ((0, b_pad - B), (0, 0)))

    w_ops = [prepared[n] for n in _WEIGHT_NAMES]

    in_specs = [pl.BlockSpec((tb, d1), lambda i: (i, 0)),
                pl.BlockSpec((tb, d2), lambda i: (i, 0))]
    # weights/biases: full-array blocks, constant index_map -> DMA'd once,
    # resident in VMEM across all batch tiles.
    in_specs += [pl.BlockSpec(w.shape, lambda i: (0, 0)) for w in w_ops]

    flops = int(2 * b_pad * sum(prepared[n].size
                                for n in _WEIGHT_NAMES if n.endswith("_w")))
    transcendentals = int(b_pad * (128 + 128 + 128 + n_out_p))   # tanh x2, sigmoid x2
    bytes_accessed = int(
        (x1.size + x2.size) * 2
        + b_pad * n_out_p * jnp.dtype(out_dtype).itemsize
        + sum(prepared[n].size * (2 if n.endswith("_w") else 4)
              for n in _WEIGHT_NAMES))

    out = pl.pallas_call(
        autoencoder_kernel,
        out_shape=jax.ShapeDtypeStruct((b_pad, n_out_p), out_dtype),
        grid=(b_pad // tb,),
        in_specs=in_specs,
        out_specs=pl.BlockSpec((tb, n_out_p), lambda i: (i, 0)),
        compiler_params=pltpu.CompilerParams(
            dimension_semantics=("parallel",)),
        cost_estimate=pl.CostEstimate(
            flops=flops,
            transcendentals=transcendentals,
            bytes_accessed=bytes_accessed),
    )(x1, x2, *w_ops)

    if b_pad != B or n_out_p != num_student:
        out = out[:B, :num_student]
    return out


def autoencoder_forward_ref(inputs, question_info, params):
    """Pure-JAX f32 reference with identical semantics (for correctness check)."""
    x = jnp.concatenate([inputs, question_info], axis=1).astype(jnp.float32)
    h = jax.nn.relu(x @ params["g1_w"].T + params["g1_b"])
    h = jnp.tanh(h @ params["g2_w"].T + params["g2_b"])
    h = jax.nn.sigmoid(h @ params["g3_w"].T + params["g3_b"])
    y = jnp.tanh(h @ params["h3_w"].T + params["h3_b"])
    y = jax.nn.relu(y @ params["h2_w"].T + params["h2_b"])
    y = jax.nn.sigmoid(y @ params["h1_w"].T + params["h1_b"])
    return y


if __name__ == "__main__":
    num_student = 64
    batch = 8

    key = jax.random.PRNGKey(0)
    key, k_in, k_q, k_p = jax.random.split(key, 4)

    inputs = jax.random.uniform(k_in, (batch, num_student), jnp.float32)
    question_info = jax.random.uniform(k_q, (batch, Q_DIM), jnp.float32)
    params = make_params(num_student, k_p)
    prepared = prepare_params(params, num_student)   # one-time weight prep

    out = autoencoder_forward(inputs, question_info, prepared, num_student)
    out = jax.block_until_ready(out)

    ref = autoencoder_forward_ref(inputs, question_info, params)
    assert out.shape == (batch, num_student)
    # bf16 matmul inputs + bf16 output (f32 accumulation) -> loosened tolerance
    # vs the f32 reference.
    err = float(jnp.max(jnp.abs(out.astype(jnp.float32) - ref)))
    assert err < 2.5e-2, f"mismatch vs reference, max abs diff = {err}"

    print("KERNEL_OK")
</pallas_src>

<mosaic_0001>
module attributes {stable_mosaic.version = 11 : i64} {
  func.func @autoencoder_kernel(%arg0: i32, %arg1: memref<8x64xbf16, #tpu.memory_space<vmem>>, %arg2: memref<8x388xbf16, #tpu.memory_space<vmem>>, %arg3: memref<64x256xbf16, #tpu.memory_space<vmem>>, %arg4: memref<388x256xbf16, #tpu.memory_space<vmem>>, %arg5: memref<1x256xf32, #tpu.memory_space<vmem>>, %arg6: memref<256x128xbf16, #tpu.memory_space<vmem>>, %arg7: memref<1x128xf32, #tpu.memory_space<vmem>>, %arg8: memref<128x128xbf16, #tpu.memory_space<vmem>>, %arg9: memref<1x128xf32, #tpu.memory_space<vmem>>, %arg10: memref<128x128xbf16, #tpu.memory_space<vmem>>, %arg11: memref<1x128xf32, #tpu.memory_space<vmem>>, %arg12: memref<128x256xbf16, #tpu.memory_space<vmem>>, %arg13: memref<1x256xf32, #tpu.memory_space<vmem>>, %arg14: memref<256x128xbf16, #tpu.memory_space<vmem>>, %arg15: memref<1x128xf32, #tpu.memory_space<vmem>>, %arg16: memref<8x128xbf16, #tpu.memory_space<vmem>>) attributes {dimension_semantics = [#tpu.dimension_semantics<parallel>], iteration_bounds = array<i64: 1>, scalar_prefetch = 0 : i64, scratch_operands = 0 : i64, tpu.core_type = #tpu.core_type<tc>, window_params = [{transform_indices = @transform_0, window_bounds = array<i64: 8, 64>}, {transform_indices = @transform_1, window_bounds = array<i64: 8, 388>}, {pipeline_mode = #tpu.pipeline_mode<synchronous>, transform_indices = @transform_2, window_bounds = array<i64: 64, 256>}, {pipeline_mode = #tpu.pipeline_mode<synchronous>, transform_indices = @transform_3, window_bounds = array<i64: 388, 256>}, {pipeline_mode = #tpu.pipeline_mode<synchronous>, transform_indices = @transform_4, window_bounds = array<i64: 1, 256>}, {pipeline_mode = #tpu.pipeline_mode<synchronous>, transform_indices = @transform_5, window_bounds = array<i64: 256, 128>}, {pipeline_mode = #tpu.pipeline_mode<synchronous>, transform_indices = @transform_6, window_bounds = array<i64: 1, 128>}, {pipeline_mode = #tpu.pipeline_mode<synchronous>, transform_indices = @transform_7, window_bounds = array<i64: 128, 128>}, {pipeline_mode = #tpu.pipeline_mode<synchronous>, transform_indices = @transform_8, window_bounds = array<i64: 1, 128>}, {pipeline_mode = #tpu.pipeline_mode<synchronous>, transform_indices = @transform_9, window_bounds = array<i64: 128, 128>}, {pipeline_mode = #tpu.pipeline_mode<synchronous>, transform_indices = @transform_10, window_bounds = array<i64: 1, 128>}, {pipeline_mode = #tpu.pipeline_mode<synchronous>, transform_indices = @transform_11, window_bounds = array<i64: 128, 256>}, {pipeline_mode = #tpu.pipeline_mode<synchronous>, transform_indices = @transform_12, window_bounds = array<i64: 1, 256>}, {pipeline_mode = #tpu.pipeline_mode<synchronous>, transform_indices = @transform_13, window_bounds = array<i64: 256, 128>}, {pipeline_mode = #tpu.pipeline_mode<synchronous>, transform_indices = @transform_14, window_bounds = array<i64: 1, 128>}, {transform_indices = @transform_15, window_bounds = array<i64: 8, 128>}]} {
    %c0 = arith.constant 0 : index
    %c0_0 = arith.constant 0 : index
    %0 = vector.load %arg1[%c0, %c0_0] : memref<8x64xbf16, #tpu.memory_space<vmem>>, vector<8x64xbf16>
    %c0_1 = arith.constant 0 : index
    %c0_2 = arith.constant 0 : index
    %1 = vector.load %arg2[%c0_1, %c0_2] : memref<8x388xbf16, #tpu.memory_space<vmem>>, vector<8x388xbf16>
    %c0_3 = arith.constant 0 : index
    %c0_4 = arith.constant 0 : index
    %2 = vector.load %arg3[%c0_3, %c0_4] : memref<64x256xbf16, #tpu.memory_space<vmem>>, vector<64x256xbf16>
    %cst = arith.constant dense<0.000000e+00> : vector<8x256xf32>
    %3 = tpu.matmul %0, %2, %cst {dimension_numbers = #tpu.dot_dimension_numbers<[1], [0], [0], [1], [0, 0, 1, 1], [], []>} : vector<8x64xbf16>, vector<64x256xbf16>, vector<8x256xf32> -> vector<8x256xf32>
    %c0_5 = arith.constant 0 : index
    %c0_6 = arith.constant 0 : index
    %4 = vector.load %arg4[%c0_5, %c0_6] : memref<388x256xbf16, #tpu.memory_space<vmem>>, vector<388x256xbf16>
    %cst_7 = arith.constant dense<0.000000e+00> : vector<8x256xf32>
    %5 = tpu.matmul %1, %4, %cst_7 {dimension_numbers = #tpu.dot_dimension_numbers<[1], [0], [0], [1], [0, 0, 1, 1], [], []>} : vector<8x388xbf16>, vector<388x256xbf16>, vector<8x256xf32> -> vector<8x256xf32>
    %6 = arith.addf %3, %5 : vector<8x256xf32>
    %c0_8 = arith.constant 0 : index
    %c0_9 = arith.constant 0 : index
    %7 = vector.load %arg5[%c0_8, %c0_9] : memref<1x256xf32, #tpu.memory_space<vmem>>, vector<1x256xf32>
    %8 = vector.broadcast %7 : vector<1x256xf32> to vector<8x256xf32>
    %9 = arith.addf %6, %8 : vector<8x256xf32>
    %cst_10 = arith.constant 0.000000e+00 : f32
    %10 = vector.broadcast %cst_10 : f32 to vector<8x256xf32>
    %11 = arith.maximumf %9, %10 : vector<8x256xf32>
    %12 = arith.truncf %11 : vector<8x256xf32> to vector<8x256xbf16>
    %c0_11 = arith.constant 0 : index
    %c0_12 = arith.constant 0 : index
    %13 = vector.load %arg6[%c0_11, %c0_12] : memref<256x128xbf16, #tpu.memory_space<vmem>>, vector<256x128xbf16>
    %cst_13 = arith.constant dense<0.000000e+00> : vector<8x128xf32>
    %14 = tpu.matmul %12, %13, %cst_13 {dimension_numbers = #tpu.dot_dimension_numbers<[1], [0], [0], [1], [0, 0, 1, 1], [], []>} : vector<8x256xbf16>, vector<256x128xbf16>, vector<8x128xf32> -> vector<8x128xf32>
    %c0_14 = arith.constant 0 : index
    %c0_15 = arith.constant 0 : index
    %15 = vector.load %arg7[%c0_14, %c0_15] : memref<1x128xf32, #tpu.memory_space<vmem>>, vector<1x128xf32>
    %16 = vector.broadcast %15 : vector<1x128xf32> to vector<8x128xf32>
    %17 = arith.addf %14, %16 : vector<8x128xf32>
    %18 = math.tanh %17 : vector<8x128xf32>
    %19 = arith.truncf %18 : vector<8x128xf32> to vector<8x128xbf16>
    %c0_16 = arith.constant 0 : index
    %c0_17 = arith.constant 0 : index
    %20 = vector.load %arg8[%c0_16, %c0_17] : memref<128x128xbf16, #tpu.memory_space<vmem>>, vector<128x128xbf16>
    %cst_18 = arith.constant dense<0.000000e+00> : vector<8x128xf32>
    %21 = tpu.matmul %19, %20, %cst_18 {dimension_numbers = #tpu.dot_dimension_numbers<[1], [0], [0], [1], [0, 0, 1, 1], [], []>} : vector<8x128xbf16>, vector<128x128xbf16>, vector<8x128xf32> -> vector<8x128xf32>
    %c0_19 = arith.constant 0 : index
    %c0_20 = arith.constant 0 : index
    %22 = vector.load %arg9[%c0_19, %c0_20] : memref<1x128xf32, #tpu.memory_space<vmem>>, vector<1x128xf32>
    %23 = vector.broadcast %22 : vector<1x128xf32> to vector<8x128xf32>
    %24 = arith.addf %21, %23 : vector<8x128xf32>
    %cst_21 = arith.constant 5.000000e-01 : f32
    %25 = vector.broadcast %cst_21 : f32 to vector<8x128xf32>
    %26 = arith.mulf %25, %24 : vector<8x128xf32>
    %27 = math.tanh %26 : vector<8x128xf32>
    %cst_22 = arith.constant 5.000000e-01 : f32
    %28 = vector.broadcast %cst_22 : f32 to vector<8x128xf32>
    %29 = arith.mulf %28, %27 : vector<8x128xf32>
    %cst_23 = arith.constant 5.000000e-01 : f32
    %30 = vector.broadcast %cst_23 : f32 to vector<8x128xf32>
    %31 = arith.addf %29, %30 : vector<8x128xf32>
    %32 = arith.truncf %31 : vector<8x128xf32> to vector<8x128xbf16>
    %c0_24 = arith.constant 0 : index
    %c0_25 = arith.constant 0 : index
    %33 = vector.load %arg10[%c0_24, %c0_25] : memref<128x128xbf16, #tpu.memory_space<vmem>>, vector<128x128xbf16>
    %cst_26 = arith.constant dense<0.000000e+00> : vector<8x128xf32>
    %34 = tpu.matmul %32, %33, %cst_26 {dimension_numbers = #tpu.dot_dimension_numbers<[1], [0], [0], [1], [0, 0, 1, 1], [], []>} : vector<8x128xbf16>, vector<128x128xbf16>, vector<8x128xf32> -> vector<8x128xf32>
    %c0_27 = arith.constant 0 : index
    %c0_28 = arith.constant 0 : index
    %35 = vector.load %arg11[%c0_27, %c0_28] : memref<1x128xf32, #tpu.memory_space<vmem>>, vector<1x128xf32>
    %36 = vector.broadcast %35 : vector<1x128xf32> to vector<8x128xf32>
    %37 = arith.addf %34, %36 : vector<8x128xf32>
    %38 = math.tanh %37 : vector<8x128xf32>
    %39 = arith.truncf %38 : vector<8x128xf32> to vector<8x128xbf16>
    %c0_29 = arith.constant 0 : index
    %c0_30 = arith.constant 0 : index
    %40 = vector.load %arg12[%c0_29, %c0_30] : memref<128x256xbf16, #tpu.memory_space<vmem>>, vector<128x256xbf16>
    %cst_31 = arith.constant dense<0.000000e+00> : vector<8x256xf32>
    %41 = tpu.matmul %39, %40, %cst_31 {dimension_numbers = #tpu.dot_dimension_numbers<[1], [0], [0], [1], [0, 0, 1, 1], [], []>} : vector<8x128xbf16>, vector<128x256xbf16>, vector<8x256xf32> -> vector<8x256xf32>
    %c0_32 = arith.constant 0 : index
    %c0_33 = arith.constant 0 : index
    %42 = vector.load %arg13[%c0_32, %c0_33] : memref<1x256xf32, #tpu.memory_space<vmem>>, vector<1x256xf32>
    %43 = vector.broadcast %42 : vector<1x256xf32> to vector<8x256xf32>
    %44 = arith.addf %41, %43 : vector<8x256xf32>
    %cst_34 = arith.constant 0.000000e+00 : f32
    %45 = vector.broadcast %cst_34 : f32 to vector<8x256xf32>
    %46 = arith.maximumf %44, %45 : vector<8x256xf32>
    %47 = arith.truncf %46 : vector<8x256xf32> to vector<8x256xbf16>
    %c0_35 = arith.constant 0 : index
    %c0_36 = arith.constant 0 : index
    %48 = vector.load %arg14[%c0_35, %c0_36] : memref<256x128xbf16, #tpu.memory_space<vmem>>, vector<256x128xbf16>
    %cst_37 = arith.constant dense<0.000000e+00> : vector<8x128xf32>
    %49 = tpu.matmul %47, %48, %cst_37 {dimension_numbers = #tpu.dot_dimension_numbers<[1], [0], [0], [1], [0, 0, 1, 1], [], []>} : vector<8x256xbf16>, vector<256x128xbf16>, vector<8x128xf32> -> vector<8x128xf32>
    %c0_38 = arith.constant 0 : index
    %c0_39 = arith.constant 0 : index
    %50 = vector.load %arg15[%c0_38, %c0_39] : memref<1x128xf32, #tpu.memory_space<vmem>>, vector<1x128xf32>
    %51 = vector.broadcast %50 : vector<1x128xf32> to vector<8x128xf32>
    %52 = arith.addf %49, %51 : vector<8x128xf32>
    %cst_40 = arith.constant 5.000000e-01 : f32
    %53 = vector.broadcast %cst_40 : f32 to vector<8x128xf32>
    %54 = arith.mulf %53, %52 : vector<8x128xf32>
    %55 = math.tanh %54 : vector<8x128xf32>
    %cst_41 = arith.constant 5.000000e-01 : f32
    %56 = vector.broadcast %cst_41 : f32 to vector<8x128xf32>
    %57 = arith.mulf %56, %55 : vector<8x128xf32>
    %cst_42 = arith.constant 5.000000e-01 : f32
    %58 = vector.broadcast %cst_42 : f32 to vector<8x128xf32>
    %59 = arith.addf %57, %58 : vector<8x128xf32>
    %60 = arith.truncf %59 : vector<8x128xf32> to vector<8x128xbf16>
    %c0_43 = arith.constant 0 : index
    %c0_44 = arith.constant 0 : index
    %61 = vector.load %arg16[%c0_43, %c0_44] : memref<8x128xbf16, #tpu.memory_space<vmem>>, vector<8x128xbf16>
    tpu.vector_store %arg16[%c0_43, %c0_44], %60 {strides = array<i32>} : memref<8x128xbf16, #tpu.memory_space<vmem>>, vector<8x128xbf16>,
    return
  }
  func.func @transform_0(%arg0: i32) -> (i32, i32) {
    %c0_i32 = arith.constant 0 : i32
    %c0_i32_0 = arith.constant 0 : i32
    return %arg0, %c0_i32 : i32, i32
  }
  func.func @transform_1(%arg0: i32) -> (i32, i32) {
    %c0_i32 = arith.constant 0 : i32
    %c0_i32_0 = arith.constant 0 : i32
    return %arg0, %c0_i32 : i32, i32
  }
  func.func @transform_2(%arg0: i32) -> (i32, i32) {
    %c0_i32 = arith.constant 0 : i32
    %c0_i32_0 = arith.constant 0 : i32
    %c0_i32_1 = arith.constant 0 : i32
    return %c0_i32, %c0_i32_0 : i32, i32
  }
  func.func @transform_3(%arg0: i32) -> (i32, i32) {
    %c0_i32 = arith.constant 0 : i32
    %c0_i32_0 = arith.constant 0 : i32
    %c0_i32_1 = arith.constant 0 : i32
    return %c0_i32, %c0_i32_0 : i32, i32
  }
  func.func @transform_4(%arg0: i32) -> (i32, i32) {
    %c0_i32 = arith.constant 0 : i32
    %c0_i32_0 = arith.constant 0 : i32
    %c0_i32_1 = arith.constant 0 : i32
    return %c0_i32, %c0_i32_0 : i32, i32
  }
  func.func @transform_5(%arg0: i32) -> (i32, i32) {
    %c0_i32 = arith.constant 0 : i32
    %c0_i32_0 = arith.constant 0 : i32
    %c0_i32_1 = arith.constant 0 : i32
    return %c0_i32, %c0_i32_0 : i32, i32
  }
  func.func @transform_6(%arg0: i32) -> (i32, i32) {
    %c0_i32 = arith.constant 0 : i32
    %c0_i32_0 = arith.constant 0 : i32
    %c0_i32_1 = arith.constant 0 : i32
    return %c0_i32, %c0_i32_0 : i32, i32
  }
  func.func @transform_7(%arg0: i32) -> (i32, i32) {
    %c0_i32 = arith.constant 0 : i32
    %c0_i32_0 = arith.constant 0 : i32
    %c0_i32_1 = arith.constant 0 : i32
    return %c0_i32, %c0_i32_0 : i32, i32
  }
  func.func @transform_8(%arg0: i32) -> (i32, i32) {
    %c0_i32 = arith.constant 0 : i32
    %c0_i32_0 = arith.constant 0 : i32
    %c0_i32_1 = arith.constant 0 : i32
    return %c0_i32, %c0_i32_0 : i32, i32
  }
  func.func @transform_9(%arg0: i32) -> (i32, i32) {
    %c0_i32 = arith.constant 0 : i32
    %c0_i32_0 = arith.constant 0 : i32
    %c0_i32_1 = arith.constant 0 : i32
    return %c0_i32, %c0_i32_0 : i32, i32
  }
  func.func @transform_10(%arg0: i32) -> (i32, i32) {
    %c0_i32 = arith.constant 0 : i32
    %c0_i32_0 = arith.constant 0 : i32
    %c0_i32_1 = arith.constant 0 : i32
    return %c0_i32, %c0_i32_0 : i32, i32
  }
  func.func @transform_11(%arg0: i32) -> (i32, i32) {
    %c0_i32 = arith.constant 0 : i32
    %c0_i32_0 = arith.constant 0 : i32
    %c0_i32_1 = arith.constant 0 : i32
    return %c0_i32, %c0_i32_0 : i32, i32
  }
  func.func @transform_12(%arg0: i32) -> (i32, i32) {
    %c0_i32 = arith.constant 0 : i32
    %c0_i32_0 = arith.constant 0 : i32
    %c0_i32_1 = arith.constant 0 : i32
    return %c0_i32, %c0_i32_0 : i32, i32
  }
  func.func @transform_13(%arg0: i32) -> (i32, i32) {
    %c0_i32 = arith.constant 0 : i32
    %c0_i32_0 = arith.constant 0 : i32
    %c0_i32_1 = arith.constant 0 : i32
    return %c0_i32, %c0_i32_0 : i32, i32
  }
  func.func @transform_14(%arg0: i32) -> (i32, i32) {
    %c0_i32 = arith.constant 0 : i32
    %c0_i32_0 = arith.constant 0 : i32
    %c0_i32_1 = arith.constant 0 : i32
    return %c0_i32, %c0_i32_0 : i32, i32
  }
  func.func @transform_15(%arg0: i32) -> (i32, i32) {
    %c0_i32 = arith.constant 0 : i32
    %c0_i32_0 = arith.constant 0 : i32
    return %arg0, %c0_i32 : i32, i32
  }
}

</mosaic_0001>

<llo_original>
// kernel: tpu_custom_call.1
$region0: #{tpu_custom_call.1}
  #allocation0 [shape = 'u32[]', space=smem, size = 0x4, offset = 0x4, fixed_abs, tag = 'smem constant byte address 0x4 - core index']
  #allocation1 [shape = 'u32[144,128]{1,0:T(1,128)}', space=vmem, size = 0x12000, scoped, tag = 'internal scratch']
  %s0 = inlined_call_operand.hbm [shape: bf16[8,64], index: 0, kind: input, shape index: {}]
  %s1 = inlined_call_operand.hbm [shape: bf16[8,388], index: 1, kind: input, shape index: {}]
  %s2 = inlined_call_operand.hbm [shape: bf16[64,256], index: 2, kind: input, shape index: {}]
  %s3 = inlined_call_operand.hbm [shape: bf16[388,256], index: 3, kind: input, shape index: {}]
  %s4 = inlined_call_operand.vmem [shape: f32[1,256], index: 4, kind: input, shape index: {}]
  %s5 = inlined_call_operand.hbm [shape: bf16[256,128], index: 5, kind: input, shape index: {}]
  %s6 = inlined_call_operand.vmem [shape: f32[1,128], index: 6, kind: input, shape index: {}]
  %s7 = inlined_call_operand.hbm [shape: bf16[128,128], index: 7, kind: input, shape index: {}]
  %s8 = inlined_call_operand.vmem [shape: f32[1,128], index: 8, kind: input, shape index: {}]
  %s9 = inlined_call_operand.hbm [shape: bf16[128,128], index: 9, kind: input, shape index: {}]
  %s10 = inlined_call_operand.vmem [shape: f32[1,128], index: 10, kind: input, shape index: {}]
  %s11 = inlined_call_operand.hbm [shape: bf16[128,256], index: 11, kind: input, shape index: {}]
  %s12 = inlined_call_operand.vmem [shape: f32[1,256], index: 12, kind: input, shape index: {}]
  %s13 = inlined_call_operand.hbm [shape: bf16[256,128], index: 13, kind: input, shape index: {}]
  %s14 = inlined_call_operand.vmem [shape: f32[1,128], index: 14, kind: input, shape index: {}]
  %s15 = inlined_call_operand.hbm [shape: bf16[8,128], index: 15, kind: output, shape index: {}]
  %s16 = sld [smem:[#allocation0]]
  $region106: #{tpu_custom_call.1} parent=0
    _
  %s18 = ssub.s32 1, %s16
  %s19 = scalar_select 0, %s18, %s16
  $region1: #{tpu_custom_call.1} parent=0
    #allocation2 [shape = 'u8[2048]{0}', space=vmem, size = 0x800, scoped, tag = 'input window, operand 0, single buffered']
    #allocation3 [shape = 's32[1]{0}', space=sflag, size = 0x4, scoped, tag = 'scoped memory for tpu_custom_call.1']
    #allocation4 [shape = 's32[1]{0}', space=sflag, size = 0x4, scoped, tag = 'scoped memory for tpu_custom_call.1']
    #allocation5 [shape = 'u8[8192]{0}', space=vmem, size = 0x2000, scoped, tag = 'input window, operand 1, single buffered']
    #allocation6 [shape = 's32[1]{0}', space=sflag, size = 0x4, scoped, tag = 'scoped memory for tpu_custom_call.1']
    #allocation7 [shape = 'u8[32768]{0}', space=vmem, size = 0x8000, scoped, tag = 'input window, operand 2, single buffered']
    #allocation8 [shape = 'u8[200704]{0}', space=vmem, size = 0x31000, scoped, tag = 'input window, operand 3, single buffered']
    #allocation9 [shape = 's32[1]{0}', space=sflag, size = 0x4, scoped, tag = 'scoped memory for tpu_custom_call.1']
    #allocation10 [shape = 'u8[65536]{0}', space=vmem, size = 0x10000, scoped, tag = 'input window, operand 5, single buffered']
    #allocation11 [shape = 'u8[32768]{0}', space=vmem, size = 0x8000, scoped, tag = 'input window, operand 7, single buffered']
    #allocation12 [shape = 's32[1]{0}', space=sflag, size = 0x4, scoped, tag = 'scoped memory for tpu_custom_call.1']
    #allocation13 [shape = 'u8[32768]{0}', space=vmem, size = 0x8000, scoped, tag = 'input window, operand 9, single buffered']
    #allocation14 [shape = 'u8[65536]{0}', space=vmem, size = 0x10000, scoped, tag = 'input window, operand 11, single buffered']
    #allocation15 [shape = 's32[1]{0}', space=sflag, size = 0x4, scoped, tag = 'scoped memory for tpu_custom_call.1']
    #allocation16 [shape = 'u8[65536]{0}', space=vmem, size = 0x10000, scoped, tag = 'input window, operand 13, single buffered']
    #allocation17 [shape = 'u8[2048]{0}', space=vmem, size = 0x800, scoped, tag = 'output window, operand 0, single buffered']
    %20 = vsyncpa [#allocation3], 0
    %21 = vsyncpa [#allocation6], 0
    %22 = vsyncpa [#allocation9], 0
    %23 = vsyncpa [#allocation12], 0
    %24 = vsyncpa [#allocation15], 0
    %25 = vsyncpa [#allocation4], 0
    // Predicated region
    $region2: #{tpu_custom_call.1} parent=1 // pred_check
      _
    $region3: #{tpu_custom_call.1} parent=1 // pred_check_branch
      %27 = sbr.rel (0) target = $region5
    $region4: #{tpu_custom_call.1} parent=1 // pred_region
      %s29 = ssub.s32 64, 64
      %30 = vsyncadd [#allocation3], %s29
      %s32 = sshll.u32 [#allocation2], 4
      %s33 = int_to_ptr.vmem [resolvable:$true] %s32
      %35 = dma.hbm_to_vmem [thread:$0]  %s0, 64, %s33, [#allocation3]
    $region5: #{tpu_custom_call.1} parent=1 // pred_fallthru
      _
    // Predicated region
    $region6: #{tpu_custom_call.1} parent=1 // pred_check
      _
    $region7: #{tpu_custom_call.1} parent=1 // pred_check_branch
      %37 = sbr.rel (0) target = $region9
    $region8: #{tpu_custom_call.1} parent=1 // pred_region
      %s39 = ssub.s32 256, 256
      %40 = vsyncadd [#allocation6], %s39
      %s42 = sshll.u32 [#allocation5], 4
      %s43 = int_to_ptr.vmem [resolvable:$true] %s42
      %45 = dma.hbm_to_vmem [thread:$0]  %s1, 256, %s43, [#allocation6]
    $region9: #{tpu_custom_call.1} parent=1 // pred_fallthru
      _
    // Predicated region
    $region10: #{tpu_custom_call.1} parent=1 // pred_check
      _
    $region11: #{tpu_custom_call.1} parent=1 // pred_check_branch
      %47 = sbr.rel (0) target = $region13
    $region12: #{tpu_custom_call.1} parent=1 // pred_region
      %s49 = ssub.s32 1024, 1024
      %50 = vsyncadd [#allocation6], %s49
      %s51 = sshll.u32 [#allocation7], 4
      %s52 = int_to_ptr.vmem [resolvable:$true] %s51
      %57 = dma.hbm_to_vmem [thread:$0]  %s2, 1024, %s52, [#allocation6], 128, 128, 8
    $region13: #{tpu_custom_call.1} parent=1 // pred_fallthru
      _
    // Predicated region
    $region14: #{tpu_custom_call.1} parent=1 // pred_check
      _
    $region15: #{tpu_custom_call.1} parent=1 // pred_check_branch
      %59 = sbr.rel (0) target = $region17
    $region16: #{tpu_custom_call.1} parent=1 // pred_region
      %s61 = ssub.s32 6272, 6272
      %62 = vsyncadd [#allocation9], %s61
      %s63 = sshll.u32 [#allocation8], 4
      %s64 = int_to_ptr.vmem [resolvable:$true] %s63
      %69 = dma.hbm_to_vmem [thread:$0]  %s3, 6272, %s64, [#allocation9], 128, 128, 8
    $region17: #{tpu_custom_call.1} parent=1 // pred_fallthru
      _
    // Predicated region
    $region18: #{tpu_custom_call.1} parent=1 // pred_check
      _
    $region19: #{tpu_custom_call.1} parent=1 // pred_check_branch
      %71 = sbr.rel (0) target = $region21
    $region20: #{tpu_custom_call.1} parent=1 // pred_region
      _
    $region21: #{tpu_custom_call.1} parent=1 // pred_fallthru
      _
    // Predicated region
    $region22: #{tpu_custom_call.1} parent=1 // pred_check
      _
    $region23: #{tpu_custom_call.1} parent=1 // pred_check_branch
      %73 = sbr.rel (0) target = $region25
    $region24: #{tpu_custom_call.1} parent=1 // pred_region
      %s75 = ssub.s32 2048, 2048
      %76 = vsyncadd [#allocation9], %s75
      %s77 = sshll.u32 [#allocation10], 4
      %s78 = int_to_ptr.vmem [resolvable:$true] %s77
      %83 = dma.hbm_to_vmem [thread:$0]  %s5, 2048, %s78, [#allocation9], 64, 64, 4
    $region25: #{tpu_custom_call.1} parent=1 // pred_fallthru
      _
    // Predicated region
    $region26: #{tpu_custom_call.1} parent=1 // pred_check
      _
    $region27: #{tpu_custom_call.1} parent=1 // pred_check_branch
      %85 = sbr.rel (0) target = $region29
    $region28: #{tpu_custom_call.1} parent=1 // pred_region
      _
    $region29: #{tpu_custom_call.1} parent=1 // pred_fallthru
      _
    // Predicated region
    $region30: #{tpu_custom_call.1} parent=1 // pred_check
      _
    $region31: #{tpu_custom_call.1} parent=1 // pred_check_branch
      %87 = sbr.rel (0) target = $region33
    $region32: #{tpu_custom_call.1} parent=1 // pred_region
      %s89 = ssub.s32 1024, 1024
      %90 = vsyncadd [#allocation12], %s89
      %s91 = sshll.u32 [#allocation11], 4
      %s92 = int_to_ptr.vmem [resolvable:$true] %s91
      %97 = dma.hbm_to_vmem [thread:$0]  %s7, 1024, %s92, [#allocation12], 64, 64, 4
    $region33: #{tpu_custom_call.1} parent=1 // pred_fallthru
      _
    // Predicated region
    $region34: #{tpu_custom_call.1} parent=1 // pred_check
      _
    $region35: #{tpu_custom_call.1} parent=1 // pred_check_branch
      %99 = sbr.rel (0) target = $region37
    $region36: #{tpu_custom_call.1} parent=1 // pred_region
      _
    $region37: #{tpu_custom_call.1} parent=1 // pred_fallthru
      _
    // Predicated region
    $region38: #{tpu_custom_call.1} parent=1 // pred_check
      _
    $region39: #{tpu_custom_call.1} parent=1 // pred_check_branch
      %101 = sbr.rel (0) target = $region41
    $region40: #{tpu_custom_call.1} parent=1 // pred_region
      %s103 = ssub.s32 1024, 1024
      %104 = vsyncadd [#allocation12], %s103
      %s105 = sshll.u32 [#allocation13], 4
      %s106 = int_to_ptr.vmem [resolvable:$true] %s105
      %111 = dma.hbm_to_vmem [thread:$0]  %s9, 1024, %s106, [#allocation12], 64, 64, 4
    $region41: #{tpu_custom_call.1} parent=1 // pred_fallthru
      _
    // Predicated region
    $region42: #{tpu_custom_call.1} parent=1 // pred_check
      _
    $region43: #{tpu_custom_call.1} parent=1 // pred_check_branch
      %113 = sbr.rel (0) target = $region45
    $region44: #{tpu_custom_call.1} parent=1 // pred_region
      _
    $region45: #{tpu_custom_call.1} parent=1 // pred_fallthru
      _
    // Predicated region
    $region46: #{tpu_custom_call.1} parent=1 // pred_check
      _
    $region47: #{tpu_custom_call.1} parent=1 // pred_check_branch
      %115 = sbr.rel (0) target = $region49
    $region48: #{tpu_custom_call.1} parent=1 // pred_region
      %s117 = ssub.s32 2048, 2048
      %118 = vsyncadd [#allocation15], %s117
      %s119 = sshll.u32 [#allocation14], 4
      %s120 = int_to_ptr.vmem [resolvable:$true] %s119
      %125 = dma.hbm_to_vmem [thread:$0]  %s11, 2048, %s120, [#allocation15], 128, 128, 8
    $region49: #{tpu_custom_call.1} parent=1 // pred_fallthru
      _
    // Predicated region
    $region50: #{tpu_custom_call.1} parent=1 // pred_check
      _
    $region51: #{tpu_custom_call.1} parent=1 // pred_check_branch
      %127 = sbr.rel (0) target = $region53
    $region52: #{tpu_custom_call.1} parent=1 // pred_region
      _
    $region53: #{tpu_custom_call.1} parent=1 // pred_fallthru
      _
    // Predicated region
    $region54: #{tpu_custom_call.1} parent=1 // pred_check
      _
    $region55: #{tpu_custom_call.1} parent=1 // pred_check_branch
      %129 = sbr.rel (0) target = $region57
    $region56: #{tpu_custom_call.1} parent=1 // pred_region
      %s131 = ssub.s32 2048, 2048
      %132 = vsyncadd [#allocation15], %s131
      %s133 = sshll.u32 [#allocation16], 4
      %s134 = int_to_ptr.vmem [resolvable:$true] %s133
      %139 = dma.hbm_to_vmem [thread:$0]  %s13, 2048, %s134, [#allocation15], 64, 64, 4
    $region57: #{tpu_custom_call.1} parent=1 // pred_fallthru
      _
    // Predicated region
    $region58: #{tpu_custom_call.1} parent=1 // pred_check
      _
    $region59: #{tpu_custom_call.1} parent=1 // pred_check_branch
      %141 = sbr.rel (0) target = $region61
    $region60: #{tpu_custom_call.1} parent=1 // pred_region
      _
    $region61: #{tpu_custom_call.1} parent=1 // pred_fallthru
      _
    // Predicated region
    $region62: #{tpu_custom_call.1} parent=1 // pred_check
      _
    $region63: #{tpu_custom_call.1} parent=1 // pred_check_branch
      %143 = sbr.rel (0) target = $region65
    $region64: #{tpu_custom_call.1} parent=1 // pred_region
      %144 = dma.done [#allocation3], 64
    $region65: #{tpu_custom_call.1} parent=1 // pred_fallthru
      _
    // Predicated region
    $region66: #{tpu_custom_call.1} parent=1 // pred_check
      _
    $region67: #{tpu_custom_call.1} parent=1 // pred_check_branch
      %146 = sbr.rel (0) target = $region69
    $region68: #{tpu_custom_call.1} parent=1 // pred_region
      %147 = dma.done [#allocation6], 256
    $region69: #{tpu_custom_call.1} parent=1 // pred_fallthru
      _
    // Predicated region
    $region70: #{tpu_custom_call.1} parent=1 // pred_check
      _
    $region71: #{tpu_custom_call.1} parent=1 // pred_check_branch
      %149 = sbr.rel (0) target = $region73
    $region72: #{tpu_custom_call.1} parent=1 // pred_region
      %150 = dma.done [#allocation6], 1024
    $region73: #{tpu_custom_call.1} parent=1 // pred_fallthru
      _
    // Predicated region
    $region74: #{tpu_custom_call.1} parent=1 // pred_check
      _
    $region75: #{tpu_custom_call.1} parent=1 // pred_check_branch
      %152 = sbr.rel (0) target = $region77
    $region76: #{tpu_custom_call.1} parent=1 // pred_region
      %153 = dma.done [#allocation9], 6272
    $region77: #{tpu_custom_call.1} parent=1 // pred_fallthru
      _
    // Predicated region
    $region78: #{tpu_custom_call.1} parent=1 // pred_check
      _
    $region79: #{tpu_custom_call.1} parent=1 // pred_check_branch
      %155 = sbr.rel (0) target = $region81
    $region80: #{tpu_custom_call.1} parent=1 // pred_region
      %156 = dma.done [#allocation9], 2048
    $region81: #{tpu_custom_call.1} parent=1 // pred_fallthru
      _
    // Predicated region
    $region82: #{tpu_custom_call.1} parent=1 // pred_check
      _
    $region83: #{tpu_custom_call.1} parent=1 // pred_check_branch
      %158 = sbr.rel (0) target = $region85
    $region84: #{tpu_custom_call.1} parent=1 // pred_region
      %159 = dma.done [#allocation12], 1024
    $region85: #{tpu_custom_call.1} parent=1 // pred_fallthru
      _
    // Predicated region
    $region86: #{tpu_custom_call.1} parent=1 // pred_check
      _
    $region87: #{tpu_custom_call.1} parent=1 // pred_check_branch
      %161 = sbr.rel (0) target = $region89
    $region88: #{tpu_custom_call.1} parent=1 // pred_region
      %162 = dma.done [#allocation12], 1024
    $region89: #{tpu_custom_call.1} parent=1 // pred_fallthru
      _
    // Predicated region
    $region90: #{tpu_custom_call.1} parent=1 // pred_check
      _
    $region91: #{tpu_custom_call.1} parent=1 // pred_check_branch
      %164 = sbr.rel (0) target = $region93
    $region92: #{tpu_custom_call.1} parent=1 // pred_region
      %165 = dma.done [#allocation15], 2048
    $region93: #{tpu_custom_call.1} parent=1 // pred_fallthru
      _
    // Predicated region
    $region94: #{tpu_custom_call.1} parent=1 // pred_check
      _
    $region95: #{tpu_custom_call.1} parent=1 // pred_check_branch
      %167 = sbr.rel (0) target = $region97
    $region96: #{tpu_custom_call.1} parent=1 // pred_region
      %168 = dma.done [#allocation15], 2048
    $region97: #{tpu_custom_call.1} parent=1 // pred_fallthru
      _
    %v170 = vld [vmem:[#allocation2] sm:$0xf]
    %v171 = vld [vmem:[#allocation5] sm:$0xff]
    %v172 = vld [vmem:[#allocation5 + $0x8] sm:$0xff]
    %v173 = vld [vmem:[#allocation7] sm:$0xff]
    %v174 = vld [vmem:[#allocation7 + $0x8] sm:$0xff]
    %v175 = vld [vmem:[#allocation7 + $0x10] sm:$0xff]
    %v176 = vld [vmem:[#allocation7 + $0x18] sm:$0xff]
    %v177 = vld [vmem:[#allocation7 + $0x20] sm:$0xff]
    %v178 = vld [vmem:[#allocation7 + $0x28] sm:$0xff]
    %v179 = vld [vmem:[#allocation7 + $0x30] sm:$0xff]
    %v180 = vld [vmem:[#allocation7 + $0x38] sm:$0xff]
    %v181 = vld [vmem:[#allocation8] sm:$0xff]
    %v182 = vld [vmem:[#allocation8 + $0x8] sm:$0xff]
    %v183 = vld [vmem:[#allocation8 + $0x10] sm:$0xff]
    %v184 = vld [vmem:[#allocation8 + $0x18] sm:$0xff]
    %v185 = vld [vmem:[#allocation8 + $0x20] sm:$0xff]
    %v186 = vld [vmem:[#allocation8 + $0x28] sm:$0xff]
    %v187 = vld [vmem:[#allocation8 + $0x30] sm:$0xff]
    %v188 = vld [vmem:[#allocation8 + $0x38] sm:$0xff]
    %v189 = vld [vmem:[#allocation8 + $0x40] sm:$0xff]
    %v190 = vld [vmem:[#allocation8 + $0x48] sm:$0xff]
    %v191 = vld [vmem:[#allocation8 + $0x50] sm:$0xff]
    %v192 = vld [vmem:[#allocation8 + $0x58] sm:$0xff]
    %v193 = vld [vmem:[#allocation8 + $0x60] sm:$0xff]
    %v194 = vld [vmem:[#allocation8 + $0x68] sm:$0xff]
    %v195 = vld [vmem:[#allocation8 + $0x70] sm:$0xff]
    %v196 = vld [vmem:[#allocation8 + $0x78] sm:$0xff]
    %v197 = vld [vmem:[#allocation8 + $0x80] sm:$0xff]
    %v198 = vld [vmem:[#allocation8 + $0x88] sm:$0xff]
    %v199 = vld [vmem:[#allocation8 + $0x90] sm:$0xff]
    %v200 = vld [vmem:[#allocation8 + $0x98] sm:$0xff]
    %v201 = vld [vmem:[#allocation8 + $0xa0] sm:$0xff]
    %v202 = vld [vmem:[#allocation8 + $0xa8] sm:$0xff]
    %v203 = vld [vmem:[#allocation8 + $0xb0] sm:$0xff]
    %v204 = vld [vmem:[#allocation8 + $0xb8] sm:$0xff]
    %v205 = vld [vmem:[#allocation8 + $0xc0] sm:$0xff]
    %v206 = vld [vmem:[#allocation8 + $0xc8] sm:$0xff]
    %v207 = vld [vmem:[#allocation8 + $0xd0] sm:$0xff]
    %v208 = vld [vmem:[#allocation8 + $0xd8] sm:$0xff]
    %v209 = vld [vmem:[#allocation8 + $0xe0] sm:$0xff]
    %v210 = vld [vmem:[#allocation8 + $0xe8] sm:$0xff]
    %v211 = vld [vmem:[#allocation8 + $0xf0] sm:$0xff]
    %v212 = vld [vmem:[#allocation8 + $0xf8] sm:$0xff]
    %v213 = vld [vmem:[#allocation8 + $0x100] sm:$0xff]
    %v214 = vld [vmem:[#allocation8 + $0x108] sm:$0xff]
    %v215 = vld [vmem:[#allocation8 + $0x110] sm:$0xff]
    %v216 = vld [vmem:[#allocation8 + $0x118] sm:$0xff]
    %v217 = vld [vmem:[#allocation8 + $0x120] sm:$0xff]
    %v218 = vld [vmem:[#allocation8 + $0x128] sm:$0xff]
    %v219 = vld [vmem:[#allocation8 + $0x130] sm:$0xff]
    %v220 = vld [vmem:[#allocation8 + $0x138] sm:$0xff]
    %v221 = vld [vmem:[#allocation8 + $0x140] sm:$0xff]
    %v222 = vld [vmem:[#allocation8 + $0x148] sm:$0xff]
    %v223 = vld [vmem:[#allocation8 + $0x150] sm:$0xff]
    %v224 = vld [vmem:[#allocation8 + $0x158] sm:$0xff]
    %v225 = vld [vmem:[#allocation8 + $0x160] sm:$0xff]
    %v226 = vld [vmem:[#allocation8 + $0x168] sm:$0xff]
    %v227 = vld [vmem:[#allocation8 + $0x170] sm:$0xff]
    %v228 = vld [vmem:[#allocation8 + $0x178] sm:$0xff]
    %v229 = vld [vmem:[#allocation8 + $0x180] sm:$0x33]
    %v232 = vunpack.c.l.b16 %v171
    %v233 = vunpack.c.h.b16 %v171
    %v234 = vunpack.c.l.b16 %v172
    %v235 = vunpack.c.h.b16 %v172
    %v236 = vpack.c.b16 %v232, %v232
    %v237 = vpack.c.b16 %v233, %v233
    %v238 = vpack.c.b16 %v234, %v234
    %v239 = vpack.c.b16 %v235, %v235
    %v292 = vunpack.c.l.b16 %v181
    %v293 = vunpack.c.h.b16 %v181
    %v294 = vunpack.c.l.b16 %v182
    %v295 = vunpack.c.h.b16 %v182
    %v296 = vunpack.c.l.b16 %v183
    %v297 = vunpack.c.h.b16 %v183
    %v298 = vunpack.c.l.b16 %v184
    %v299 = vunpack.c.h.b16 %v184
    %v300 = vunpack.c.l.b16 %v185
    %v301 = vunpack.c.h.b16 %v185
    %v302 = vunpack.c.l.b16 %v186
    %v303 = vunpack.c.h.b16 %v186
    %v304 = vunpack.c.l.b16 %v187
    %v305 = vunpack.c.h.b16 %v187
    %v306 = vunpack.c.l.b16 %v188
    %v307 = vunpack.c.h.b16 %v188
    %v308 = vunpack.c.l.b16 %v189
    %v309 = vunpack.c.h.b16 %v189
    %v310 = vunpack.c.l.b16 %v190
    %v311 = vunpack.c.h.b16 %v190
    %v312 = vunpack.c.l.b16 %v191
    %v313 = vunpack.c.h.b16 %v191
    %v314 = vunpack.c.l.b16 %v192
    %v315 = vunpack.c.h.b16 %v192
    %v316 = vunpack.c.l.b16 %v193
    %v317 = vunpack.c.h.b16 %v193
    %v318 = vunpack.c.l.b16 %v194
    %v319 = vunpack.c.h.b16 %v194
    %v320 = vunpack.c.l.b16 %v195
    %v321 = vunpack.c.h.b16 %v195
    %v322 = vunpack.c.l.b16 %v196
    %v323 = vunpack.c.h.b16 %v196
    %v324 = vunpack.c.l.b16 %v197
    %v325 = vunpack.c.h.b16 %v197
    %v326 = vunpack.c.l.b16 %v198
    %v327 = vunpack.c.h.b16 %v198
    %v328 = vunpack.c.l.b16 %v199
    %v329 = vunpack.c.h.b16 %v199
    %v330 = vunpack.c.l.b16 %v200
    %v331 = vunpack.c.h.b16 %v200
    %v332 = vunpack.c.l.b16 %v201
    %v333 = vunpack.c.h.b16 %v201
    %v334 = vunpack.c.l.b16 %v202
    %v335 = vunpack.c.h.b16 %v202
    %v336 = vunpack.c.l.b16 %v203
    %v337 = vunpack.c.h.b16 %v203
    %v338 = vunpack.c.l.b16 %v204
    %v339 = vunpack.c.h.b16 %v204
    %v340 = vunpack.c.l.b16 %v205
    %v341 = vunpack.c.h.b16 %v205
    %v342 = vunpack.c.l.b16 %v206
    %v343 = vunpack.c.h.b16 %v206
    %v344 = vunpack.c.l.b16 %v207
    %v345 = vunpack.c.h.b16 %v207
    %v346 = vunpack.c.l.b16 %v208
    %v347 = vunpack.c.h.b16 %v208
    %v348 = vunpack.c.l.b16 %v209
    %v349 = vunpack.c.h.b16 %v209
    %v350 = vunpack.c.l.b16 %v210
    %v351 = vunpack.c.h.b16 %v210
    %v352 = vunpack.c.l.b16 %v211
    %v353 = vunpack.c.h.b16 %v211
    %v354 = vunpack.c.l.b16 %v212
    %v355 = vunpack.c.h.b16 %v212
    %v356 = vunpack.c.l.b16 %v213
    %v357 = vunpack.c.h.b16 %v213
    %v358 = vunpack.c.l.b16 %v214
    %v359 = vunpack.c.h.b16 %v214
    %v360 = vunpack.c.l.b16 %v215
    %v361 = vunpack.c.h.b16 %v215
    %v362 = vunpack.c.l.b16 %v216
    %v363 = vunpack.c.h.b16 %v216
    %v364 = vunpack.c.l.b16 %v217
    %v365 = vunpack.c.h.b16 %v217
    %v366 = vunpack.c.l.b16 %v218
    %v367 = vunpack.c.h.b16 %v218
    %v368 = vunpack.c.l.b16 %v219
    %v369 = vunpack.c.h.b16 %v219
    %v370 = vunpack.c.l.b16 %v220
    %v371 = vunpack.c.h.b16 %v220
    %v372 = vunpack.c.l.b16 %v221
    %v373 = vunpack.c.h.b16 %v221
    %v374 = vunpack.c.l.b16 %v222
    %v375 = vunpack.c.h.b16 %v222
    %v376 = vunpack.c.l.b16 %v223
    %v377 = vunpack.c.h.b16 %v223
    %v378 = vunpack.c.l.b16 %v224
    %v379 = vunpack.c.h.b16 %v224
    %v380 = vunpack.c.l.b16 %v225
    %v381 = vunpack.c.h.b16 %v225
    %v382 = vunpack.c.l.b16 %v226
    %v383 = vunpack.c.h.b16 %v226
    %v384 = vunpack.c.l.b16 %v227
    %v385 = vunpack.c.h.b16 %v227
    %v386 = vunpack.c.l.b16 %v228
    %v387 = vunpack.c.h.b16 %v228
    %v388 = vunpack.c.l.b16 %v229
    %v389 = vunpack.c.h.b16 %v229
    %v390 = vpack.c.b16 %v294, %v292
    %v391 = vpack.c.b16 %v295, %v293
    %v392 = vpack.c.b16 %v298, %v296
    %v393 = vpack.c.b16 %v299, %v297
    %v394 = vpack.c.b16 %v302, %v300
    %v395 = vpack.c.b16 %v303, %v301
    %v396 = vpack.c.b16 %v306, %v304
    %v397 = vpack.c.b16 %v307, %v305
    %v398 = vpack.c.b16 %v310, %v308
    %v399 = vpack.c.b16 %v311, %v309
    %v400 = vpack.c.b16 %v314, %v312
    %v401 = vpack.c.b16 %v315, %v313
    %v402 = vpack.c.b16 %v318, %v316
    %v403 = vpack.c.b16 %v319, %v317
    %v404 = vpack.c.b16 %v322, %v320
    %v405 = vpack.c.b16 %v323, %v321
    %v406 = vpack.c.b16 %v326, %v324
    %v407 = vpack.c.b16 %v327, %v325
    %v408 = vpack.c.b16 %v330, %v328
    %v409 = vpack.c.b16 %v331, %v329
    %v410 = vpack.c.b16 %v334, %v332
    %v411 = vpack.c.b16 %v335, %v333
    %v412 = vpack.c.b16 %v338, %v336
    %v413 = vpack.c.b16 %v339, %v337
    %v414 = vpack.c.b16 %v342, %v340
    %v415 = vpack.c.b16 %v343, %v341
    %v416 = vpack.c.b16 %v346, %v344
    %v417 = vpack.c.b16 %v347, %v345
    %v418 = vpack.c.b16 %v350, %v348
    %v419 = vpack.c.b16 %v351, %v349
    %v420 = vpack.c.b16 %v354, %v352
    %v421 = vpack.c.b16 %v355, %v353
    %v422 = vpack.c.b16 %v358, %v356
    %v423 = vpack.c.b16 %v359, %v357
    %v424 = vpack.c.b16 %v362, %v360
    %v425 = vpack.c.b16 %v363, %v361
    %v426 = vpack.c.b16 %v366, %v364
    %v427 = vpack.c.b16 %v367, %v365
    %v428 = vpack.c.b16 %v370, %v368
    %v429 = vpack.c.b16 %v371, %v369
    %v430 = vpack.c.b16 %v374, %v372
    %v431 = vpack.c.b16 %v375, %v373
    %v432 = vpack.c.b16 %v378, %v376
    %v433 = vpack.c.b16 %v379, %v377
    %v434 = vpack.c.b16 %v382, %v380
    %v435 = vpack.c.b16 %v383, %v381
    %v436 = vpack.c.b16 %v386, %v384
    %v437 = vpack.c.b16 %v387, %v385
    %v438 = vpack.c.b16 %v388, %v388
    %v439 = vpack.c.b16 %v389, %v389
    %vm488 = vcmask 31744
    %v490 = vsel %vm488, %v239, 0
    %vm492 = vcmask 1041408
    %v494 = vsel %vm492, %v438, 0
    %v497 = vsel %vm492, %v439, 0
    %499 = vmatprep.subr.bf16.mxu0 %v391
    %500 = vmatpush1.bf16.msra.mxu0 %v390
    %501 = vmatprep.subr.bf16.mxu0 %v393
    %502 = vmatpush1.bf16.msra.mxu0 %v392
    %503 = vmatprep.subr.bf16.mxu0 %v395
    %504 = vmatpush1.bf16.msra.mxu0 %v394
    %505 = vmatprep.subr.bf16.mxu0 %v397
    %506 = vmatpush1.bf16.msra.mxu0 %v396
    %507 = vmatprep.subr.bf16.mxu0 %v399
    %508 = vmatpush1.bf16.msra.mxu0 %v398
    %509 = vmatprep.subr.bf16.mxu0 %v401
    %510 = vmatpush1.bf16.msra.mxu0 %v400
    %511 = vmatprep.subr.bf16.mxu0 %v403
    %512 = vmatpush1.bf16.msra.mxu0 %v402
    %513 = vmatprep.subr.bf16.mxu0 %v405
    %514 = vmatpush1.bf16.msra.mxu0 %v404
    %515 = vmatprep.subr.bf16.mxu0 %v407
    %516 = vmatpush1.bf16.msra.mxu0 %v406
    %517 = vmatprep.subr.bf16.mxu0 %v409
    %518 = vmatpush1.bf16.msra.mxu0 %v408
    %519 = vmatprep.subr.bf16.mxu0 %v411
    %520 = vmatpush1.bf16.msra.mxu0 %v410
    %521 = vmatprep.subr.bf16.mxu0 %v413
    %522 = vmatpush1.bf16.msra.mxu0 %v412
    %523 = vmatprep.subr.bf16.mxu0 %v415
    %524 = vmatpush1.bf16.msra.mxu0 %v414
    %525 = vmatprep.subr.bf16.mxu0 %v417
    %526 = vmatpush1.bf16.msra.mxu0 %v416
    %527 = vmatprep.subr.bf16.mxu0 %v419
    %528 = vmatpush1.bf16.msra.mxu0 %v418
    %529 = vmatprep.subr.bf16.mxu0 %v421
    %530 = vmatpush1.bf16.msra.mxu0 %v420
    %531 = vmatprep.mubr.bf16.mxu0 %v237
    %532 = vmatmul.mubr.bf16.gmra.mrb[0].mxu0 %v236
    %v533 = vpop.f32.mrb[0].mxu0
    %v534 = vadd.f32 0.0, %v533
    %v535 = vpop.f32.mrb[0].mxu0
    %v536 = vadd.f32 0.0, %v535
    %v537 = vpop.f32.mrb[0].mxu0
    %v538 = vpop.f32.mrb[0].mxu0
    %539 = vdwg.mxu0
    %540 = vmatprep.subr.bf16.mxu0 %v423
    %541 = vmatpush1.bf16.msra.mxu0 %v422
    %542 = vmatprep.subr.bf16.mxu0 %v425
    %543 = vmatpush1.bf16.msra.mxu0 %v424
    %544 = vmatprep.subr.bf16.mxu0 %v427
    %545 = vmatpush1.bf16.msra.mxu0 %v426
    %546 = vmatprep.subr.bf16.mxu0 %v429
    %547 = vmatpush1.bf16.msra.mxu0 %v428
    %548 = vmatprep.subr.bf16.mxu0 %v431
    %549 = vmatpush1.bf16.msra.mxu0 %v430
    %550 = vmatprep.subr.bf16.mxu0 %v433
    %551 = vmatpush1.bf16.msra.mxu0 %v432
    %552 = vmatprep.subr.bf16.mxu0 %v435
    %553 = vmatpush1.bf16.msra.mxu0 %v434
    %554 = vmatprep.subr.bf16.mxu0 %v437
    %555 = vmatpush1.bf16.msra.mxu0 %v436
    %556 = vmatprep.subr.bf16.mxu0 %v497
    %557 = vmatpush1.bf16.msra.mxu0 %v494
    %558 = vmatprep.subr.bf16.mxu0 0
    %559 = vmatpush1.bf16.msra.mxu0 0
    %560 = vmatprep.subr.bf16.mxu0 0
    %561 = vmatpush1.bf16.msra.mxu0 0
    %562 = vmatprep.subr.bf16.mxu0 0
    %563 = vmatpush1.bf16.msra.mxu0 0
    %564 = vmatprep.subr.bf16.mxu0 0
    %565 = vmatpush1.bf16.msra.mxu0 0
    %566 = vmatprep.subr.bf16.mxu0 0
    %567 = vmatpush1.bf16.msra.mxu0 0
    %568 = vmatprep.subr.bf16.mxu0 0
    %569 = vmatpush1.bf16.msra.mxu0 0
    %570 = vmatprep.subr.bf16.mxu0 0
    %571 = vmatpush1.bf16.msra.mxu0 0
    %572 = vmatprep.mubr.bf16.mxu0 %v490
    %573 = vmatmul.mubr.bf16.gmra.mrb[0].mxu0 %v238
    %v574 = vpop.f32.mrb[0].mxu0
    %v575 = vadd.f32 %v534, %v574
    %v576 = vpop.f32.mrb[0].mxu0
    %v577 = vadd.f32 %v536, %v576
    %v578 = vpop.f32.mrb[0].mxu0
    %v579 = vpop.f32.mrb[0].mxu0
    %580 = vdwg.mxu0
    %v589 = vunpack.c.l.b16 %v173
    %v590 = vunpack.c.h.b16 %v173
    %v591 = vunpack.c.l.b16 %v174
    %v592 = vunpack.c.h.b16 %v174
    %v593 = vunpack.c.l.b16 %v175
    %v594 = vunpack.c.h.b16 %v175
    %v595 = vunpack.c.l.b16 %v176
    %v596 = vunpack.c.h.b16 %v176
    %v597 = vunpack.c.l.b16 %v177
    %v598 = vunpack.c.h.b16 %v177
    %v599 = vunpack.c.l.b16 %v178
    %v600 = vunpack.c.h.b16 %v178
    %v601 = vunpack.c.l.b16 %v179
    %v602 = vunpack.c.h.b16 %v179
    %v603 = vunpack.c.l.b16 %v180
    %v604 = vunpack.c.h.b16 %v180
    %v605 = vpack.c.b16 %v591, %v589
    %v606 = vpack.c.b16 %v592, %v590
    %v607 = vpack.c.b16 %v595, %v593
    %v608 = vpack.c.b16 %v596, %v594
    %v609 = vpack.c.b16 %v599, %v597
    %v610 = vpack.c.b16 %v600, %v598
    %v611 = vpack.c.b16 %v603, %v601
    %v612 = vpack.c.b16 %v604, %v602
    %vm621 = vcmask 523264
    %v623 = vsel %vm621, %v170, 0
    %625 = vmatprep.subr.bf16.mxu0 %v606
    %626 = vmatpush1.bf16.msra.mxu0 %v605
    %627 = vmatprep.subr.bf16.mxu0 %v608
    %628 = vmatpush1.bf16.msra.mxu0 %v607
    %629 = vmatprep.subr.bf16.mxu0 %v610
    %630 = vmatpush1.bf16.msra.mxu0 %v609
    %631 = vmatprep.subr.bf16.mxu0 %v612
    %632 = vmatpush1.bf16.msra.mxu0 %v611
    %633 = vmatprep.subr.bf16.mxu0 0
    %634 = vmatpush1.bf16.msra.mxu0 0
    %635 = vmatprep.subr.bf16.mxu0 0
    %636 = vmatpush1.bf16.msra.mxu0 0
    %637 = vmatprep.subr.bf16.mxu0 0
    %638 = vmatpush1.bf16.msra.mxu0 0
    %639 = vmatprep.subr.bf16.mxu0 0
    %640 = vmatpush1.bf16.msra.mxu0 0
    %641 = vmatprep.subr.bf16.mxu0 0
    %642 = vmatpush1.bf16.msra.mxu0 0
    %643 = vmatprep.subr.bf16.mxu0 0
    %644 = vmatpush1.bf16.msra.mxu0 0
    %645 = vmatprep.subr.bf16.mxu0 0
    %646 = vmatpush1.bf16.msra.mxu0 0
    %647 = vmatprep.subr.bf16.mxu0 0
    %648 = vmatpush1.bf16.msra.mxu0 0
    %649 = vmatprep.subr.bf16.mxu0 0
    %650 = vmatpush1.bf16.msra.mxu0 0
    %651 = vmatprep.subr.bf16.mxu0 0
    %652 = vmatpush1.bf16.msra.mxu0 0
    %653 = vmatprep.subr.bf16.mxu0 0
    %654 = vmatpush1.bf16.msra.mxu0 0
    %655 = vmatprep.subr.bf16.mxu0 0
    %656 = vmatpush1.bf16.msra.mxu0 0
    %657 = vmatprep.mubr.bf16.mxu0 0
    %658 = vmatmul.mubr.bf16.gmra.mrb[0].mxu0 %v623
    %v659 = vpop.f32.mrb[0].mxu0
    %v660 = vadd.f32 %v575, %v659
    %v661 = vpop.f32.mrb[0].mxu0
    %v662 = vadd.f32 %v577, %v661
    %v663 = vpop.f32.mrb[0].mxu0
    %v664 = vpop.f32.mrb[0].mxu0
    %665 = vdwg.mxu0
    %v666 = vld [vmem:[%s4] sm:$0x3]
    %v668 = vlaneseq
    %v669 = vshrl.u32 %v668, 7
    %v670 = vsub.s32 0, %v669
    %v671 = vrot.slane %v666, %v670
    %v672 = vlaneseq
    %v673 = vshrl.u32 %v672, 7
    %v674 = vsub.s32 1, %v673
    %v675 = vrot.slane %v666, %v674
    %v678 = vadd.f32 %v660, %v671
    %v679 = vadd.f32 %v662, %v675
    %v680 = vmax.f32 %v678, 0.0
    %v681 = vmax.f32 %v679, 0.0
    %v682 = vpack.c.bf16 %v680, %v680
    %v683 = vpack.c.bf16 %v681, %v681
    %v684 = vld [vmem:[#allocation10] sm:$0xf]
    %v685 = vld [vmem:[#allocation10 + $0x4] sm:$0xf]
    %v686 = vld [vmem:[#allocation10 + $0x8] sm:$0xf]
    %v687 = vld [vmem:[#allocation10 + $0xc] sm:$0xf]
    %v688 = vld [vmem:[#allocation10 + $0x10] sm:$0xf]
    %v689 = vld [vmem:[#allocation10 + $0x14] sm:$0xf]
    %v690 = vld [vmem:[#allocation10 + $0x18] sm:$0xf]
    %v691 = vld [vmem:[#allocation10 + $0x1c] sm:$0xf]
    %v692 = vld [vmem:[#allocation10 + $0x20] sm:$0xf]
    %v693 = vld [vmem:[#allocation10 + $0x24] sm:$0xf]
    %v694 = vld [vmem:[#allocation10 + $0x28] sm:$0xf]
    %v695 = vld [vmem:[#allocation10 + $0x2c] sm:$0xf]
    %v696 = vld [vmem:[#allocation10 + $0x30] sm:$0xf]
    %v697 = vld [vmem:[#allocation10 + $0x34] sm:$0xf]
    %v698 = vld [vmem:[#allocation10 + $0x38] sm:$0xf]
    %v699 = vld [vmem:[#allocation10 + $0x3c] sm:$0xf]
    %v700 = vld [vmem:[#allocation10 + $0x40] sm:$0xf]
    %v701 = vld [vmem:[#allocation10 + $0x44] sm:$0xf]
    %v702 = vld [vmem:[#allocation10 + $0x48] sm:$0xf]
    %v703 = vld [vmem:[#allocation10 + $0x4c] sm:$0xf]
    %v704 = vld [vmem:[#allocation10 + $0x50] sm:$0xf]
    %v705 = vld [vmem:[#allocation10 + $0x54] sm:$0xf]
    %v706 = vld [vmem:[#allocation10 + $0x58] sm:$0xf]
    %v707 = vld [vmem:[#allocation10 + $0x5c] sm:$0xf]
    %v708 = vld [vmem:[#allocation10 + $0x60] sm:$0xf]
    %v709 = vld [vmem:[#allocation10 + $0x64] sm:$0xf]
    %v710 = vld [vmem:[#allocation10 + $0x68] sm:$0xf]
    %v711 = vld [vmem:[#allocation10 + $0x6c] sm:$0xf]
    %v712 = vld [vmem:[#allocation10 + $0x70] sm:$0xf]
    %v713 = vld [vmem:[#allocation10 + $0x74] sm:$0xf]
    %v714 = vld [vmem:[#allocation10 + $0x78] sm:$0xf]
    %v715 = vld [vmem:[#allocation10 + $0x7c] sm:$0xf]
    %v716 = vld [vmem:[%s6] sm:$0x1]
    %v718 = vlaneseq
    %v719 = vshrl.u32 %v718, 7
    %v720 = vsub.s32 0, %v719
    %v721 = vrot.slane %v716, %v720
    %v755 = vunpack.c.l.b16 %v684
    %v756 = vunpack.c.l.b16 %v685
    %v757 = vunpack.c.l.b16 %v686
    %v758 = vunpack.c.l.b16 %v687
    %v759 = vunpack.c.l.b16 %v688
    %v760 = vunpack.c.l.b16 %v689
    %v761 = vunpack.c.l.b16 %v690
    %v762 = vunpack.c.l.b16 %v691
    %v763 = vunpack.c.l.b16 %v692
    %v764 = vunpack.c.l.b16 %v693
    %v765 = vunpack.c.l.b16 %v694
    %v766 = vunpack.c.l.b16 %v695
    %v767 = vunpack.c.l.b16 %v696
    %v768 = vunpack.c.l.b16 %v697
    %v769 = vunpack.c.l.b16 %v698
    %v770 = vunpack.c.l.b16 %v699
    %v771 = vunpack.c.l.b16 %v700
    %v772 = vunpack.c.l.b16 %v701
    %v773 = vunpack.c.l.b16 %v702
    %v774 = vunpack.c.l.b16 %v703
    %v775 = vunpack.c.l.b16 %v704
    %v776 = vunpack.c.l.b16 %v705
    %v777 = vunpack.c.l.b16 %v706
    %v778 = vunpack.c.l.b16 %v707
    %v779 = vunpack.c.l.b16 %v708
    %v780 = vunpack.c.l.b16 %v709
    %v781 = vunpack.c.l.b16 %v710
    %v782 = vunpack.c.l.b16 %v711
    %v783 = vunpack.c.l.b16 %v712
    %v784 = vunpack.c.l.b16 %v713
    %v785 = vunpack.c.l.b16 %v714
    %v786 = vunpack.c.l.b16 %v715
    %v787 = vpack.c.b16 %v756, %v755
    %v788 = vpack.c.b16 %v758, %v757
    %v789 = vpack.c.b16 %v760, %v759
    %v790 = vpack.c.b16 %v762, %v761
    %v791 = vpack.c.b16 %v764, %v763
    %v792 = vpack.c.b16 %v766, %v765
    %v793 = vpack.c.b16 %v768, %v767
    %v794 = vpack.c.b16 %v770, %v769
    %v795 = vpack.c.b16 %v772, %v771
    %v796 = vpack.c.b16 %v774, %v773
    %v797 = vpack.c.b16 %v776, %v775
    %v798 = vpack.c.b16 %v778, %v777
    %v799 = vpack.c.b16 %v780, %v779
    %v800 = vpack.c.b16 %v782, %v781
    %v801 = vpack.c.b16 %v784, %v783
    %v802 = vpack.c.b16 %v786, %v785
    %819 = vmatprep.subr.bf16.mxu0 0
    %820 = vmatpush1.bf16.msra.mxu0 %v787
    %821 = vmatprep.subr.bf16.mxu0 0
    %822 = vmatpush1.bf16.msra.mxu0 %v788
    %823 = vmatprep.subr.bf16.mxu0 0
    %824 = vmatpush1.bf16.msra.mxu0 %v789
    %825 = vmatprep.subr.bf16.mxu0 0
    %826 = vmatpush1.bf16.msra.mxu0 %v790
    %827 = vmatprep.subr.bf16.mxu0 0
    %828 = vmatpush1.bf16.msra.mxu0 %v791
    %829 = vmatprep.subr.bf16.mxu0 0
    %830 = vmatpush1.bf16.msra.mxu0 %v792
    %831 = vmatprep.subr.bf16.mxu0 0
    %832 = vmatpush1.bf16.msra.mxu0 %v793
    %833 = vmatprep.subr.bf16.mxu0 0
    %834 = vmatpush1.bf16.msra.mxu0 %v794
    %835 = vmatprep.subr.bf16.mxu0 0
    %836 = vmatpush1.bf16.msra.mxu0 %v795
    %837 = vmatprep.subr.bf16.mxu0 0
    %838 = vmatpush1.bf16.msra.mxu0 %v796
    %839 = vmatprep.subr.bf16.mxu0 0
    %840 = vmatpush1.bf16.msra.mxu0 %v797
    %841 = vmatprep.subr.bf16.mxu0 0
    %842 = vmatpush1.bf16.msra.mxu0 %v798
    %843 = vmatprep.subr.bf16.mxu0 0
    %844 = vmatpush1.bf16.msra.mxu0 %v799
    %845 = vmatprep.subr.bf16.mxu0 0
    %846 = vmatpush1.bf16.msra.mxu0 %v800
    %847 = vmatprep.subr.bf16.mxu0 0
    %848 = vmatpush1.bf16.msra.mxu0 %v801
    %849 = vmatprep.subr.bf16.mxu0 0
    %850 = vmatpush1.bf16.msra.mxu0 %v802
    %851 = vmatprep.mubr.bf16.mxu0 %v683
    %852 = vmatmul.mubr.bf16.gmra.mrb[0].mxu0 %v682
    %v853 = vpop.f32.mrb[0].mxu0
    %v854 = vadd.f32 %v721, %v853
    %v855 = vpop.f32.mrb[0].mxu0
    %v856 = vpop.f32.mrb[0].mxu0
    %v857 = vpop.f32.mrb[0].mxu0
    %858 = vdwg.mxu0
    %v859 = vtanh.pop %v854
    %v860 = vpack.c.bf16 %v859, %v859
    %v861 = vld [vmem:[#allocation11] sm:$0xf]
    %v862 = vld [vmem:[#allocation11 + $0x4] sm:$0xf]
    %v863 = vld [vmem:[#allocation11 + $0x8] sm:$0xf]
    %v864 = vld [vmem:[#allocation11 + $0xc] sm:$0xf]
    %v865 = vld [vmem:[#allocation11 + $0x10] sm:$0xf]
    %v866 = vld [vmem:[#allocation11 + $0x14] sm:$0xf]
    %v867 = vld [vmem:[#allocation11 + $0x18] sm:$0xf]
    %v868 = vld [vmem:[#allocation11 + $0x1c] sm:$0xf]
    %v869 = vld [vmem:[#allocation11 + $0x20] sm:$0xf]
    %v870 = vld [vmem:[#allocation11 + $0x24] sm:$0xf]
    %v871 = vld [vmem:[#allocation11 + $0x28] sm:$0xf]
    %v872 = vld [vmem:[#allocation11 + $0x2c] sm:$0xf]
    %v873 = vld [vmem:[#allocation11 + $0x30] sm:$0xf]
    %v874 = vld [vmem:[#allocation11 + $0x34] sm:$0xf]
    %v875 = vld [vmem:[#allocation11 + $0x38] sm:$0xf]
    %v876 = vld [vmem:[#allocation11 + $0x3c] sm:$0xf]
    %v877 = vld [vmem:[%s8] sm:$0x1]
    %v879 = vlaneseq
    %v880 = vshrl.u32 %v879, 7
    %v881 = vsub.s32 0, %v880
    %v882 = vrot.slane %v877, %v881
    %v900 = vunpack.c.l.b16 %v861
    %v901 = vunpack.c.l.b16 %v862
    %v902 = vunpack.c.l.b16 %v863
    %v903 = vunpack.c.l.b16 %v864
    %v904 = vunpack.c.l.b16 %v865
    %v905 = vunpack.c.l.b16 %v866
    %v906 = vunpack.c.l.b16 %v867
    %v907 = vunpack.c.l.b16 %v868
    %v908 = vunpack.c.l.b16 %v869
    %v909 = vunpack.c.l.b16 %v870
    %v910 = vunpack.c.l.b16 %v871
    %v911 = vunpack.c.l.b16 %v872
    %v912 = vunpack.c.l.b16 %v873
    %v913 = vunpack.c.l.b16 %v874
    %v914 = vunpack.c.l.b16 %v875
    %v915 = vunpack.c.l.b16 %v876
    %v916 = vpack.c.b16 %v901, %v900
    %v917 = vpack.c.b16 %v903, %v902
    %v918 = vpack.c.b16 %v905, %v904
    %v919 = vpack.c.b16 %v907, %v906
    %v920 = vpack.c.b16 %v909, %v908
    %v921 = vpack.c.b16 %v911, %v910
    %v922 = vpack.c.b16 %v913, %v912
    %v923 = vpack.c.b16 %v915, %v914
    %932 = vmatprep.subr.bf16.mxu0 0
    %933 = vmatpush1.bf16.msra.mxu0 %v916
    %934 = vmatprep.subr.bf16.mxu0 0
    %935 = vmatpush1.bf16.msra.mxu0 %v917
    %936 = vmatprep.subr.bf16.mxu0 0
    %937 = vmatpush1.bf16.msra.mxu0 %v918
    %938 = vmatprep.subr.bf16.mxu0 0
    %939 = vmatpush1.bf16.msra.mxu0 %v919
    %940 = vmatprep.subr.bf16.mxu0 0
    %941 = vmatpush1.bf16.msra.mxu0 %v920
    %942 = vmatprep.subr.bf16.mxu0 0
    %943 = vmatpush1.bf16.msra.mxu0 %v921
    %944 = vmatprep.subr.bf16.mxu0 0
    %945 = vmatpush1.bf16.msra.mxu0 %v922
    %946 = vmatprep.subr.bf16.mxu0 0
    %947 = vmatpush1.bf16.msra.mxu0 %v923
    %948 = vmatprep.subr.bf16.mxu0 0
    %949 = vmatpush1.bf16.msra.mxu0 0
    %950 = vmatprep.subr.bf16.mxu0 0
    %951 = vmatpush1.bf16.msra.mxu0 0
    %952 = vmatprep.subr.bf16.mxu0 0
    %953 = vmatpush1.bf16.msra.mxu0 0
    %954 = vmatprep.subr.bf16.mxu0 0
    %955 = vmatpush1.bf16.msra.mxu0 0
    %956 = vmatprep.subr.bf16.mxu0 0
    %957 = vmatpush1.bf16.msra.mxu0 0
    %958 = vmatprep.subr.bf16.mxu0 0
    %959 = vmatpush1.bf16.msra.mxu0 0
    %960 = vmatprep.subr.bf16.mxu0 0
    %961 = vmatpush1.bf16.msra.mxu0 0
    %962 = vmatprep.subr.bf16.mxu0 0
    %963 = vmatpush1.bf16.msra.mxu0 0
    %964 = vmatprep.mubr.bf16.mxu0 0
    %965 = vmatmul.mubr.bf16.gmra.mrb[0].mxu0 %v860
    %v966 = vpop.f32.mrb[0].mxu0
    %v967 = vadd.f32 %v882, %v966
    %v968 = vpop.f32.mrb[0].mxu0
    %v969 = vpop.f32.mrb[0].mxu0
    %v970 = vpop.f32.mrb[0].mxu0
    %971 = vdwg.mxu0
    %v972 = vmul.f32 %v967, 0.5
    %v973 = vtanh.pop %v972
    %v974 = vmul.f32 %v973, 0.5
    %v975 = vadd.f32 %v974, 0.5
    %v976 = vpack.c.bf16 %v975, %v975
    %v977 = vld [vmem:[#allocation13] sm:$0xf]
    %v978 = vld [vmem:[#allocation13 + $0x4] sm:$0xf]
    %v979 = vld [vmem:[#allocation13 + $0x8] sm:$0xf]
    %v980 = vld [vmem:[#allocation13 + $0xc] sm:$0xf]
    %v981 = vld [vmem:[#allocation13 + $0x10] sm:$0xf]
    %v982 = vld [vmem:[#allocation13 + $0x14] sm:$0xf]
    %v983 = vld [vmem:[#allocation13 + $0x18] sm:$0xf]
    %v984 = vld [vmem:[#allocation13 + $0x1c] sm:$0xf]
    %v985 = vld [vmem:[#allocation13 + $0x20] sm:$0xf]
    %v986 = vld [vmem:[#allocation13 + $0x24] sm:$0xf]
    %v987 = vld [vmem:[#allocation13 + $0x28] sm:$0xf]
    %v988 = vld [vmem:[#allocation13 + $0x2c] sm:$0xf]
    %v989 = vld [vmem:[#allocation13 + $0x30] sm:$0xf]
    %v990 = vld [vmem:[#allocation13 + $0x34] sm:$0xf]
    %v991 = vld [vmem:[#allocation13 + $0x38] sm:$0xf]
    %v992 = vld [vmem:[#allocation13 + $0x3c] sm:$0xf]
    %v993 = vld [vmem:[%s10] sm:$0x1]
    %v995 = vlaneseq
    %v996 = vshrl.u32 %v995, 7
    %v997 = vsub.s32 0, %v996
    %v998 = vrot.slane %v993, %v997
    %v1016 = vunpack.c.l.b16 %v977
    %v1017 = vunpack.c.l.b16 %v978
    %v1018 = vunpack.c.l.b16 %v979
    %v1019 = vunpack.c.l.b16 %v980
    %v1020 = vunpack.c.l.b16 %v981
    %v1021 = vunpack.c.l.b16 %v982
    %v1022 = vunpack.c.l.b16 %v983
    %v1023 = vunpack.c.l.b16 %v984
    %v1024 = vunpack.c.l.b16 %v985
    %v1025 = vunpack.c.l.b16 %v986
    %v1026 = vunpack.c.l.b16 %v987
    %v1027 = vunpack.c.l.b16 %v988
    %v1028 = vunpack.c.l.b16 %v989
    %v1029 = vunpack.c.l.b16 %v990
    %v1030 = vunpack.c.l.b16 %v991
    %v1031 = vunpack.c.l.b16 %v992
    %v1032 = vpack.c.b16 %v1017, %v1016
    %v1033 = vpack.c.b16 %v1019, %v1018
    %v1034 = vpack.c.b16 %v1021, %v1020
    %v1035 = vpack.c.b16 %v1023, %v1022
    %v1036 = vpack.c.b16 %v1025, %v1024
    %v1037 = vpack.c.b16 %v1027, %v1026
    %v1038 = vpack.c.b16 %v1029, %v1028
    %v1039 = vpack.c.b16 %v1031, %v1030
    %1048 = vmatprep.subr.bf16.mxu0 0
    %1049 = vmatpush1.bf16.msra.mxu0 %v1032
    %1050 = vmatprep.subr.bf16.mxu0 0
    %1051 = vmatpush1.bf16.msra.mxu0 %v1033
    %1052 = vmatprep.subr.bf16.mxu0 0
    %1053 = vmatpush1.bf16.msra.mxu0 %v1034
    %1054 = vmatprep.subr.bf16.mxu0 0
    %1055 = vmatpush1.bf16.msra.mxu0 %v1035
    %1056 = vmatprep.subr.bf16.mxu0 0
    %1057 = vmatpush1.bf16.msra.mxu0 %v1036
    %1058 = vmatprep.subr.bf16.mxu0 0
    %1059 = vmatpush1.bf16.msra.mxu0 %v1037
    %1060 = vmatprep.subr.bf16.mxu0 0
    %1061 = vmatpush1.bf16.msra.mxu0 %v1038
    %1062 = vmatprep.subr.bf16.mxu0 0
    %1063 = vmatpush1.bf16.msra.mxu0 %v1039
    %1064 = vmatprep.subr.bf16.mxu0 0
    %1065 = vmatpush1.bf16.msra.mxu0 0
    %1066 = vmatprep.subr.bf16.mxu0 0
    %1067 = vmatpush1.bf16.msra.mxu0 0
    %1068 = vmatprep.subr.bf16.mxu0 0
    %1069 = vmatpush1.bf16.msra.mxu0 0
    %1070 = vmatprep.subr.bf16.mxu0 0
    %1071 = vmatpush1.bf16.msra.mxu0 0
    %1072 = vmatprep.subr.bf16.mxu0 0
    %1073 = vmatpush1.bf16.msra.mxu0 0
    %1074 = vmatprep.subr.bf16.mxu0 0
    %1075 = vmatpush1.bf16.msra.mxu0 0
    %1076 = vmatprep.subr.bf16.mxu0 0
    %1077 = vmatpush1.bf16.msra.mxu0 0
    %1078 = vmatprep.subr.bf16.mxu0 0
    %1079 = vmatpush1.bf16.msra.mxu0 0
    %1080 = vmatprep.mubr.bf16.mxu0 0
    %1081 = vmatmul.mubr.bf16.gmra.mrb[0].mxu0 %v976
    %v1082 = vpop.f32.mrb[0].mxu0
    %v1083 = vadd.f32 %v998, %v1082
    %v1084 = vpop.f32.mrb[0].mxu0
    %v1085 = vpop.f32.mrb[0].mxu0
    %v1086 = vpop.f32.mrb[0].mxu0
    %1087 = vdwg.mxu0
    %v1088 = vtanh.pop %v1083
    %v1089 = vpack.c.bf16 %v1088, %v1088
    %v1090 = vld [vmem:[#allocation14] sm:$0xff]
    %v1091 = vld [vmem:[#allocation14 + $0x8] sm:$0xff]
    %v1092 = vld [vmem:[#allocation14 + $0x10] sm:$0xff]
    %v1093 = vld [vmem:[#allocation14 + $0x18] sm:$0xff]
    %v1094 = vld [vmem:[#allocation14 + $0x20] sm:$0xff]
    %v1095 = vld [vmem:[#allocation14 + $0x28] sm:$0xff]
    %v1096 = vld [vmem:[#allocation14 + $0x30] sm:$0xff]
    %v1097 = vld [vmem:[#allocation14 + $0x38] sm:$0xff]
    %v1098 = vld [vmem:[#allocation14 + $0x40] sm:$0xff]
    %v1099 = vld [vmem:[#allocation14 + $0x48] sm:$0xff]
    %v1100 = vld [vmem:[#allocation14 + $0x50] sm:$0xff]
    %v1101 = vld [vmem:[#allocation14 + $0x58] sm:$0xff]
    %v1102 = vld [vmem:[#allocation14 + $0x60] sm:$0xff]
    %v1103 = vld [vmem:[#allocation14 + $0x68] sm:$0xff]
    %v1104 = vld [vmem:[#allocation14 + $0x70] sm:$0xff]
    %v1105 = vld [vmem:[#allocation14 + $0x78] sm:$0xff]
    %v1106 = vld [vmem:[%s12] sm:$0x3]
    %v1108 = vlaneseq
    %v1109 = vshrl.u32 %v1108, 7
    %v1110 = vsub.s32 0, %v1109
    %v1111 = vrot.slane %v1106, %v1110
    %v1112 = vlaneseq
    %v1113 = vshrl.u32 %v1112, 7
    %v1114 = vsub.s32 1, %v1113
    %v1115 = vrot.slane %v1106, %v1114
    %v1134 = vunpack.c.l.b16 %v1090
    %v1135 = vunpack.c.h.b16 %v1090
    %v1136 = vunpack.c.l.b16 %v1091
    %v1137 = vunpack.c.h.b16 %v1091
    %v1138 = vunpack.c.l.b16 %v1092
    %v1139 = vunpack.c.h.b16 %v1092
    %v1140 = vunpack.c.l.b16 %v1093
    %v1141 = vunpack.c.h.b16 %v1093
    %v1142 = vunpack.c.l.b16 %v1094
    %v1143 = vunpack.c.h.b16 %v1094
    %v1144 = vunpack.c.l.b16 %v1095
    %v1145 = vunpack.c.h.b16 %v1095
    %v1146 = vunpack.c.l.b16 %v1096
    %v1147 = vunpack.c.h.b16 %v1096
    %v1148 = vunpack.c.l.b16 %v1097
    %v1149 = vunpack.c.h.b16 %v1097
    %v1150 = vunpack.c.l.b16 %v1098
    %v1151 = vunpack.c.h.b16 %v1098
    %v1152 = vunpack.c.l.b16 %v1099
    %v1153 = vunpack.c.h.b16 %v1099
    %v1154 = vunpack.c.l.b16 %v1100
    %v1155 = vunpack.c.h.b16 %v1100
    %v1156 = vunpack.c.l.b16 %v1101
    %v1157 = vunpack.c.h.b16 %v1101
    %v1158 = vunpack.c.l.b16 %v1102
    %v1159 = vunpack.c.h.b16 %v1102
    %v1160 = vunpack.c.l.b16 %v1103
    %v1161 = vunpack.c.h.b16 %v1103
    %v1162 = vunpack.c.l.b16 %v1104
    %v1163 = vunpack.c.h.b16 %v1104
    %v1164 = vunpack.c.l.b16 %v1105
    %v1165 = vunpack.c.h.b16 %v1105
    %v1166 = vpack.c.b16 %v1136, %v1134
    %v1167 = vpack.c.b16 %v1137, %v1135
    %v1168 = vpack.c.b16 %v1140, %v1138
    %v1169 = vpack.c.b16 %v1141, %v1139
    %v1170 = vpack.c.b16 %v1144, %v1142
    %v1171 = vpack.c.b16 %v1145, %v1143
    %v1172 = vpack.c.b16 %v1148, %v1146
    %v1173 = vpack.c.b16 %v1149, %v1147
    %v1174 = vpack.c.b16 %v1152, %v1150
    %v1175 = vpack.c.b16 %v1153, %v1151
    %v1176 = vpack.c.b16 %v1156, %v1154
    %v1177 = vpack.c.b16 %v1157, %v1155
    %v1178 = vpack.c.b16 %v1160, %v1158
    %v1179 = vpack.c.b16 %v1161, %v1159
    %v1180 = vpack.c.b16 %v1164, %v1162
    %v1181 = vpack.c.b16 %v1165, %v1163
    %1198 = vmatprep.subr.bf16.mxu0 %v1167
    %1199 = vmatpush1.bf16.msra.mxu0 %v1166
    %1200 = vmatprep.subr.bf16.mxu0 %v1169
    %1201 = vmatpush1.bf16.msra.mxu0 %v1168
    %1202 = vmatprep.subr.bf16.mxu0 %v1171
    %1203 = vmatpush1.bf16.msra.mxu0 %v1170
    %1204 = vmatprep.subr.bf16.mxu0 %v1173
    %1205 = vmatpush1.bf16.msra.mxu0 %v1172
    %1206 = vmatprep.subr.bf16.mxu0 %v1175
    %1207 = vmatpush1.bf16.msra.mxu0 %v1174
    %1208 = vmatprep.subr.bf16.mxu0 %v1177
    %1209 = vmatpush1.bf16.msra.mxu0 %v1176
    %1210 = vmatprep.subr.bf16.mxu0 %v1179
    %1211 = vmatpush1.bf16.msra.mxu0 %v1178
    %1212 = vmatprep.subr.bf16.mxu0 %v1181
    %1213 = vmatpush1.bf16.msra.mxu0 %v1180
    %1214 = vmatprep.subr.bf16.mxu0 0
    %1215 = vmatpush1.bf16.msra.mxu0 0
    %1216 = vmatprep.subr.bf16.mxu0 0
    %1217 = vmatpush1.bf16.msra.mxu0 0
    %1218 = vmatprep.subr.bf16.mxu0 0
    %1219 = vmatpush1.bf16.msra.mxu0 0
    %1220 = vmatprep.subr.bf16.mxu0 0
    %1221 = vmatpush1.bf16.msra.mxu0 0
    %1222 = vmatprep.subr.bf16.mxu0 0
    %1223 = vmatpush1.bf16.msra.mxu0 0
    %1224 = vmatprep.subr.bf16.mxu0 0
    %1225 = vmatpush1.bf16.msra.mxu0 0
    %1226 = vmatprep.subr.bf16.mxu0 0
    %1227 = vmatpush1.bf16.msra.mxu0 0
    %1228 = vmatprep.subr.bf16.mxu0 0
    %1229 = vmatpush1.bf16.msra.mxu0 0
    %1230 = vmatprep.mubr.bf16.mxu0 0
    %1231 = vmatmul.mubr.bf16.gmra.mrb[0].mxu0 %v1089
    %v1232 = vpop.f32.mrb[0].mxu0
    %v1233 = vadd.f32 %v1111, %v1232
    %v1234 = vpop.f32.mrb[0].mxu0
    %v1235 = vadd.f32 %v1115, %v1234
    %v1236 = vpop.f32.mrb[0].mxu0
    %v1237 = vpop.f32.mrb[0].mxu0
    %1238 = vdwg.mxu0
    %v1239 = vmax.f32 %v1233, 0.0
    %v1240 = vmax.f32 %v1235, 0.0
    %v1241 = vpack.c.bf16 %v1239, %v1239
    %v1242 = vpack.c.bf16 %v1240, %v1240
    %v1243 = vld [vmem:[#allocation16] sm:$0xf]
    %v1244 = vld [vmem:[#allocation16 + $0x4] sm:$0xf]
    %v1245 = vld [vmem:[#allocation16 + $0x8] sm:$0xf]
    %v1246 = vld [vmem:[#allocation16 + $0xc] sm:$0xf]
    %v1247 = vld [vmem:[#allocation16 + $0x10] sm:$0xf]
    %v1248 = vld [vmem:[#allocation16 + $0x14] sm:$0xf]
    %v1249 = vld [vmem:[#allocation16 + $0x18] sm:$0xf]
    %v1250 = vld [vmem:[#allocation16 + $0x1c] sm:$0xf]
    %v1251 = vld [vmem:[#allocation16 + $0x20] sm:$0xf]
    %v1252 = vld [vmem:[#allocation16 + $0x24] sm:$0xf]
    %v1253 = vld [vmem:[#allocation16 + $0x28] sm:$0xf]
    %v1254 = vld [vmem:[#allocation16 + $0x2c] sm:$0xf]
    %v1255 = vld [vmem:[#allocation16 + $0x30] sm:$0xf]
    %v1256 = vld [vmem:[#allocation16 + $0x34] sm:$0xf]
    %v1257 = vld [vmem:[#allocation16 + $0x38] sm:$0xf]
    %v1258 = vld [vmem:[#allocation16 + $0x3c] sm:$0xf]
    %v1259 = vld [vmem:[#allocation16 + $0x40] sm:$0xf]
    %v1260 = vld [vmem:[#allocation16 + $0x44] sm:$0xf]
    %v1261 = vld [vmem:[#allocation16 + $0x48] sm:$0xf]
    %v1262 = vld [vmem:[#allocation16 + $0x4c] sm:$0xf]
    %v1263 = vld [vmem:[#allocation16 + $0x50] sm:$0xf]
    %v1264 = vld [vmem:[#allocation16 + $0x54] sm:$0xf]
    %v1265 = vld [vmem:[#allocation16 + $0x58] sm:$0xf]
    %v1266 = vld [vmem:[#allocation16 + $0x5c] sm:$0xf]
    %v1267 = vld [vmem:[#allocation16 + $0x60] sm:$0xf]
    %v1268 = vld [vmem:[#allocation16 + $0x64] sm:$0xf]
    %v1269 = vld [vmem:[#allocation16 + $0x68] sm:$0xf]
    %v1270 = vld [vmem:[#allocation16 + $0x6c] sm:$0xf]
    %v1271 = vld [vmem:[#allocation16 + $0x70] sm:$0xf]
    %v1272 = vld [vmem:[#allocation16 + $0x74] sm:$0xf]
    %v1273 = vld [vmem:[#allocation16 + $0x78] sm:$0xf]
    %v1274 = vld [vmem:[#allocation16 + $0x7c] sm:$0xf]
    %v1275 = vld [vmem:[%s14] sm:$0x1]
    %v1277 = vlaneseq
    %v1278 = vshrl.u32 %v1277, 7
    %v1279 = vsub.s32 0, %v1278
    %v1280 = vrot.slane %v1275, %v1279
    %v1314 = vunpack.c.l.b16 %v1243
    %v1315 = vunpack.c.l.b16 %v1244
    %v1316 = vunpack.c.l.b16 %v1245
    %v1317 = vunpack.c.l.b16 %v1246
    %v1318 = vunpack.c.l.b16 %v1247
    %v1319 = vunpack.c.l.b16 %v1248
    %v1320 = vunpack.c.l.b16 %v1249
    %v1321 = vunpack.c.l.b16 %v1250
    %v1322 = vunpack.c.l.b16 %v1251
    %v1323 = vunpack.c.l.b16 %v1252
    %v1324 = vunpack.c.l.b16 %v1253
    %v1325 = vunpack.c.l.b16 %v1254
    %v1326 = vunpack.c.l.b16 %v1255
    %v1327 = vunpack.c.l.b16 %v1256
    %v1328 = vunpack.c.l.b16 %v1257
    %v1329 = vunpack.c.l.b16 %v1258
    %v1330 = vunpack.c.l.b16 %v1259
    %v1331 = vunpack.c.l.b16 %v1260
    %v1332 = vunpack.c.l.b16 %v1261
    %v1333 = vunpack.c.l.b16 %v1262
    %v1334 = vunpack.c.l.b16 %v1263
    %v1335 = vunpack.c.l.b16 %v1264
    %v1336 = vunpack.c.l.b16 %v1265
    %v1337 = vunpack.c.l.b16 %v1266
    %v1338 = vunpack.c.l.b16 %v1267
    %v1339 = vunpack.c.l.b16 %v1268
    %v1340 = vunpack.c.l.b16 %v1269
    %v1341 = vunpack.c.l.b16 %v1270
    %v1342 = vunpack.c.l.b16 %v1271
    %v1343 = vunpack.c.l.b16 %v1272
    %v1344 = vunpack.c.l.b16 %v1273
    %v1345 = vunpack.c.l.b16 %v1274
    %v1346 = vpack.c.b16 %v1315, %v1314
    %v1347 = vpack.c.b16 %v1317, %v1316
    %v1348 = vpack.c.b16 %v1319, %v1318
    %v1349 = vpack.c.b16 %v1321, %v1320
    %v1350 = vpack.c.b16 %v1323, %v1322
    %v1351 = vpack.c.b16 %v1325, %v1324
    %v1352 = vpack.c.b16 %v1327, %v1326
    %v1353 = vpack.c.b16 %v1329, %v1328
    %v1354 = vpack.c.b16 %v1331, %v1330
    %v1355 = vpack.c.b16 %v1333, %v1332
    %v1356 = vpack.c.b16 %v1335, %v1334
    %v1357 = vpack.c.b16 %v1337, %v1336
    %v1358 = vpack.c.b16 %v1339, %v1338
    %v1359 = vpack.c.b16 %v1341, %v1340
    %v1360 = vpack.c.b16 %v1343, %v1342
    %v1361 = vpack.c.b16 %v1345, %v1344
    %1378 = vmatprep.subr.bf16.mxu0 0
    %1379 = vmatpush1.bf16.msra.mxu0 %v1346
    %1380 = vmatprep.subr.bf16.mxu0 0
    %1381 = vmatpush1.bf16.msra.mxu0 %v1347
    %1382 = vmatprep.subr.bf16.mxu0 0
    %1383 = vmatpush1.bf16.msra.mxu0 %v1348
    %1384 = vmatprep.subr.bf16.mxu0 0
    %1385 = vmatpush1.bf16.msra.mxu0 %v1349
    %1386 = vmatprep.subr.bf16.mxu0 0
    %1387 = vmatpush1.bf16.msra.mxu0 %v1350
    %1388 = vmatprep.subr.bf16.mxu0 0
    %1389 = vmatpush1.bf16.msra.mxu0 %v1351
    %1390 = vmatprep.subr.bf16.mxu0 0
    %1391 = vmatpush1.bf16.msra.mxu0 %v1352
    %1392 = vmatprep.subr.bf16.mxu0 0
    %1393 = vmatpush1.bf16.msra.mxu0 %v1353
    %1394 = vmatprep.subr.bf16.mxu0 0
    %1395 = vmatpush1.bf16.msra.mxu0 %v1354
    %1396 = vmatprep.subr.bf16.mxu0 0
    %1397 = vmatpush1.bf16.msra.mxu0 %v1355
    %1398 = vmatprep.subr.bf16.mxu0 0
    %1399 = vmatpush1.bf16.msra.mxu0 %v1356
    %1400 = vmatprep.subr.bf16.mxu0 0
    %1401 = vmatpush1.bf16.msra.mxu0 %v1357
    %1402 = vmatprep.subr.bf16.mxu0 0
    %1403 = vmatpush1.bf16.msra.mxu0 %v1358
    %1404 = vmatprep.subr.bf16.mxu0 0
    %1405 = vmatpush1.bf16.msra.mxu0 %v1359
    %1406 = vmatprep.subr.bf16.mxu0 0
    %1407 = vmatpush1.bf16.msra.mxu0 %v1360
    %1408 = vmatprep.subr.bf16.mxu0 0
    %1409 = vmatpush1.bf16.msra.mxu0 %v1361
    %1410 = vmatprep.mubr.bf16.mxu0 %v1242
    %1411 = vmatmul.mubr.bf16.gmra.mrb[0].mxu0 %v1241
    %v1412 = vpop.f32.mrb[0].mxu0
    %v1413 = vadd.f32 %v1280, %v1412
    %v1414 = vpop.f32.mrb[0].mxu0
    %v1415 = vpop.f32.mrb[0].mxu0
    %v1416 = vpop.f32.mrb[0].mxu0
    %1417 = vdwg.mxu0
    %v1418 = vmul.f32 %v1413, 0.5
    %v1419 = vtanh.pop %v1418
    %v1420 = vmul.f32 %v1419, 0.5
    %v1421 = vadd.f32 %v1420, 0.5
    %v1422 = vpack.c.bf16 %v1421, %v1421
    %1423 = vst [vmem:[#allocation17] sm:$0xf] %v1422
    // Predicated region
    $region98: #{tpu_custom_call.1} parent=1 // pred_check
      _
    $region99: #{tpu_custom_call.1} parent=1 // pred_check_branch
      %1425 = sbr.rel (0) target = $region101
    $region100: #{tpu_custom_call.1} parent=1 // pred_region
      %s1427 = ssub.s32 64, 64
      %1428 = vsyncadd [#allocation4], %s1427
      %s1430 = sshll.u32 [#allocation17], 4
      %s1431 = int_to_ptr.vmem [resolvable:$true] %s1430
      %1433 = dma.vmem_to_hbm [thread:$0]  %s1431, 64, %s15, [#allocation4]
    $region101: #{tpu_custom_call.1} parent=1 // pred_fallthru
      _
    // Predicated region
    $region102: #{tpu_custom_call.1} parent=1 // pred_check
      _
    $region103: #{tpu_custom_call.1} parent=1 // pred_check_branch
      %1435 = sbr.rel (0) target = $region105
    $region104: #{tpu_custom_call.1} parent=1 // pred_region
      %1436 = dma.done [#allocation4], 64
    $region105: #{tpu_custom_call.1} parent=1 // pred_fallthru
      _
    %1437 = vsyncpa [#allocation3], 1
    %1438 = vsyncpa [#allocation6], 1
    %1439 = vsyncpa [#allocation9], 1
    %1440 = vsyncpa [#allocation12], 1
    %1441 = vsyncpa [#allocation15], 1
    %1442 = vsyncpa [#allocation4], 1

</llo_original>
